<compile_context>
chip_gen: v7x
topology: tpu7x:2x2x1
jax: 0.10.0
libtpu: 0.0.40
codegen_flags: <defaults>
</compile_context>

<pallas_src>
import jax
import jax.numpy as jnp
from jax.experimental import pallas as pl
from jax.experimental.pallas import tpu as pltpu

INPUT_SIZE = 16
HIDDEN1 = 64
HIDDEN2 = 32
OUTPUT_SIZE = 4
BATCH = 512

LANES = 128
OUT_PAD = 8                           # lanes actually stored by the kernel (>= OUTPUT_SIZE)
W2_OFF = INPUT_SIZE                   # 16   (bf16 sublane-aligned row offsets in the slab)
W3_OFF = INPUT_SIZE + LANES           # 144
SLAB_ROWS = INPUT_SIZE + 2 * LANES    # 272
MAX_TILE_B = 2048


def mlp_kernel(x_ref, w_ref, b_ref, o_ref):
    # Raw f32 input tile -> bf16 for the MXU (cast inside the kernel, no wrapper op).
    x = x_ref[...].astype(jnp.bfloat16)                     # [tile_b, 16]

    # Static, 16-row-aligned views into the VMEM-resident packed weight slab.
    w1 = w_ref[0:W2_OFF, :]                                  # [16, 128]  (cols 64: are 0)
    w2 = w_ref[W2_OFF:W3_OFF, :]                             # [128, 128] (pad rows/cols 0)
    w3 = w_ref[W3_OFF:W3_OFF + LANES, :]                     # [128, 128] (pad rows/cols 0)

    b1 = b_ref[0:1, :]                                       # [1, 128] f32
    b2 = b_ref[1:2, :]
    b3 = b_ref[2:3, :]

    # fc1 + ReLU6   (bf16 MXU inputs, f32 accumulate; bias add + clamp in f32)
    h1 = jnp.dot(x, w1, preferred_element_type=jnp.float32) + b1
    h1 = jnp.minimum(jnp.maximum(h1, 0.0), 6.0)

    # fc2 + ReLU6
    h2 = jnp.dot(h1.astype(jnp.bfloat16), w2, preferred_element_type=jnp.float32) + b2
    h2 = jnp.minimum(jnp.maximum(h2, 0.0), 6.0)

    # fc3 — store only the first OUT_PAD lanes (tiny writeback; wrapper slices [:, :4])
    out = jnp.dot(h2.astype(jnp.bfloat16), w3, preferred_element_type=jnp.float32) + b3
    o_ref[...] = out[:, :OUT_PAD]


def pack_params(params):
    """Pack weights into one bf16 [272,128] slab and biases into one f32 [8,128] slab."""
    def pad_to(a, rows, cols):
        out = jnp.zeros((rows, cols), jnp.float32)
        return out.at[: a.shape[0], : a.shape[1]].set(a.astype(jnp.float32))

    w1 = pad_to(params["w1"], INPUT_SIZE, LANES)
    w2 = pad_to(params["w2"], LANES, LANES)
    w3 = pad_to(params["w3"], LANES, LANES)
    w_slab = jnp.concatenate([w1, w2, w3], axis=0).astype(jnp.bfloat16)   # [272, 128]

    b_slab = jnp.zeros((8, LANES), jnp.float32)
    b_slab = b_slab.at[0, :HIDDEN1].set(params["b1"].reshape(-1))
    b_slab = b_slab.at[1, :HIDDEN2].set(params["b2"].reshape(-1))
    b_slab = b_slab.at[2, :OUTPUT_SIZE].set(params["b3"].reshape(-1))
    return w_slab, b_slab


def _cores_per_device():
    """2 TensorCores on v7x / megacore generations, else 1 (v5e/v6e)."""
    try:
        kind = jax.devices()[0].device_kind.lower()
    except Exception:
        return 1
    for tag in ("v7", "7x", "v4", "v5p"):
        if tag in kind:
            return 2
    return 1


def _choose_tile_b(B, cores, max_tile=MAX_TILE_B):
    """Batch tile: multiple of 16, >= `cores` grid steps, capped at max_tile rows."""
    b16 = 16 * (-(-B // 16))
    steps = max(cores, -(-b16 // max_tile))
    tile = -(-b16 // steps)
    return 16 * (-(-tile // 16))


def neural_network_forward(x, w_slab, b_slab, *, tile_b=None):
    """x: [B, INPUT_SIZE] f32. Returns [B, OUTPUT_SIZE] f32."""
    B = x.shape[0]
    if tile_b is None:
        tile_b = _choose_tile_b(B, _cores_per_device())
    b_pad = tile_b * (-(-B // tile_b))
    nb = b_pad // tile_b

    xp = x
    if b_pad != B:                                    # row-pad only when required
        xp = jnp.pad(x, ((0, b_pad - B), (0, 0)))

    flops = 2 * B * (INPUT_SIZE * HIDDEN1 + HIDDEN1 * HIDDEN2 + HIDDEN2 * OUTPUT_SIZE)
    bytes_accessed = (xp.size * 4 + w_slab.size * 2 + b_slab.size * 4
                      + b_pad * OUT_PAD * 4)

    out = pl.pallas_call(
        mlp_kernel,
        out_shape=jax.ShapeDtypeStruct((b_pad, OUT_PAD), jnp.float32),
        grid=(nb,),
        in_specs=[
            pl.BlockSpec((tile_b, INPUT_SIZE), lambda i: (i, 0)),     # batch-tiled raw f32 input
            pl.BlockSpec((SLAB_ROWS, LANES), lambda i: (0, 0)),       # weights: VMEM-resident
            pl.BlockSpec((8, LANES), lambda i: (0, 0)),               # biases:  VMEM-resident
        ],
        out_specs=pl.BlockSpec((tile_b, OUT_PAD), lambda i: (i, 0)),  # narrow output
        compiler_params=pltpu.CompilerParams(dimension_semantics=("parallel",)),
        cost_estimate=pl.CostEstimate(
            flops=flops, transcendentals=0, bytes_accessed=bytes_accessed
        ),
    )(xp, w_slab, b_slab)

    return out[:B, :OUTPUT_SIZE]


def init_params(key):
    """Deterministic init mirroring nn.Linear shapes (W stored [in, out])."""
    ks = jax.random.split(key, 6)

    def uniform_init(k, fan_in, shape):
        bound = 1.0 / jnp.sqrt(jnp.float32(fan_in))
        return jax.random.uniform(k, shape, jnp.float32, -bound, bound)

    return {
        "w1": uniform_init(ks[0], INPUT_SIZE, (INPUT_SIZE, HIDDEN1)),
        "b1": uniform_init(ks[1], INPUT_SIZE, (1, HIDDEN1)),
        "w2": uniform_init(ks[2], HIDDEN1, (HIDDEN1, HIDDEN2)),
        "b2": uniform_init(ks[3], HIDDEN1, (1, HIDDEN2)),
        "w3": uniform_init(ks[4], HIDDEN2, (HIDDEN2, OUTPUT_SIZE)),
        "b3": uniform_init(ks[5], HIDDEN2, (1, OUTPUT_SIZE)),
    }


def reference_forward(x, params):
    """Pure-JAX reference mirroring the kernel's bf16-input / f32-accumulate math."""
    f32 = lambda a: a.astype(jnp.float32)
    bf = lambda a: f32(a.astype(jnp.bfloat16))
    hi = jax.lax.Precision.HIGHEST

    xb, w1, w2, w3 = bf(x), bf(params["w1"]), bf(params["w2"]), bf(params["w3"])
    h1 = jnp.clip(jnp.dot(xb, w1, precision=hi) + params["b1"], 0.0, 6.0)
    h2 = jnp.clip(jnp.dot(bf(h1), w2, precision=hi) + params["b2"], 0.0, 6.0)
    return jnp.dot(bf(h2), w3, precision=hi) + params["b3"]


if __name__ == "__main__":
    key = jax.random.PRNGKey(0)
    k_x, k_p = jax.random.split(key)

    x = jax.random.normal(k_x, (BATCH, INPUT_SIZE), jnp.float32)
    params = init_params(k_p)
    w_slab, b_slab = pack_params(params)   # one-time packing (outside the hot loop)

    out = neural_network_forward(x, w_slab, b_slab)
    out = jax.block_until_ready(out)

    ref = reference_forward(x, params)
    assert out.shape == (BATCH, OUTPUT_SIZE)
    assert jnp.allclose(out, ref, atol=1e-3, rtol=1e-3), float(jnp.abs(out - ref).max())

    print("KERNEL_OK")
</pallas_src>

<mosaic_0001>
module attributes {stable_mosaic.version = 11 : i64} {
  func.func @mlp_kernel(%arg0: i32, %arg1: memref<512x16xf32, #tpu.memory_space<vmem>>, %arg2: memref<272x128xbf16, #tpu.memory_space<vmem>>, %arg3: memref<8x128xf32, #tpu.memory_space<vmem>>, %arg4: memref<512x8xf32, #tpu.memory_space<vmem>>) attributes {dimension_semantics = [#tpu.dimension_semantics<parallel>], iteration_bounds = array<i64: 1>, scalar_prefetch = 0 : i64, scratch_operands = 0 : i64, tpu.core_type = #tpu.core_type<tc>, window_params = [{transform_indices = @transform_0, window_bounds = array<i64: 512, 16>}, {pipeline_mode = #tpu.pipeline_mode<synchronous>, transform_indices = @transform_1, window_bounds = array<i64: 272, 128>}, {pipeline_mode = #tpu.pipeline_mode<synchronous>, transform_indices = @transform_2, window_bounds = array<i64: 8, 128>}, {transform_indices = @transform_3, window_bounds = array<i64: 512, 8>}]} {
    %c0 = arith.constant 0 : index
    %c0_0 = arith.constant 0 : index
    %0 = vector.load %arg1[%c0, %c0_0] : memref<512x16xf32, #tpu.memory_space<vmem>>, vector<512x16xf32>
    %1 = arith.truncf %0 : vector<512x16xf32> to vector<512x16xbf16>
    %c0_1 = arith.constant 0 : index
    %c0_2 = arith.constant 0 : index
    %2 = vector.load %arg2[%c0_1, %c0_2] : memref<272x128xbf16, #tpu.memory_space<vmem>>, vector<16x128xbf16>
    %c16 = arith.constant 16 : index
    %c0_3 = arith.constant 0 : index
    %3 = vector.load %arg2[%c16, %c0_3] : memref<272x128xbf16, #tpu.memory_space<vmem>>, vector<128x128xbf16>
    %c144 = arith.constant 144 : index
    %c0_4 = arith.constant 0 : index
    %4 = vector.load %arg2[%c144, %c0_4] : memref<272x128xbf16, #tpu.memory_space<vmem>>, vector<128x128xbf16>
    %c0_5 = arith.constant 0 : index
    %c0_6 = arith.constant 0 : index
    %5 = vector.load %arg3[%c0_5, %c0_6] : memref<8x128xf32, #tpu.memory_space<vmem>>, vector<1x128xf32>
    %c1 = arith.constant 1 : index
    %c0_7 = arith.constant 0 : index
    %6 = vector.load %arg3[%c1, %c0_7] : memref<8x128xf32, #tpu.memory_space<vmem>>, vector<1x128xf32>
    %c2 = arith.constant 2 : index
    %c0_8 = arith.constant 0 : index
    %7 = vector.load %arg3[%c2, %c0_8] : memref<8x128xf32, #tpu.memory_space<vmem>>, vector<1x128xf32>
    %cst = arith.constant dense<0.000000e+00> : vector<512x128xf32>
    %8 = tpu.matmul %1, %2, %cst {dimension_numbers = #tpu.dot_dimension_numbers<[1], [0], [0], [1], [0, 0, 1, 1], [], []>} : vector<512x16xbf16>, vector<16x128xbf16>, vector<512x128xf32> -> vector<512x128xf32>
    %9 = vector.broadcast %5 : vector<1x128xf32> to vector<512x128xf32>
    %10 = arith.addf %8, %9 : vector<512x128xf32>
    %cst_9 = arith.constant 0.000000e+00 : f32
    %11 = vector.broadcast %cst_9 : f32 to vector<512x128xf32>
    %12 = arith.maximumf %10, %11 : vector<512x128xf32>
    %cst_10 = arith.constant 6.000000e+00 : f32
    %13 = vector.broadcast %cst_10 : f32 to vector<512x128xf32>
    %14 = arith.minimumf %12, %13 : vector<512x128xf32>
    %15 = arith.truncf %14 : vector<512x128xf32> to vector<512x128xbf16>
    %cst_11 = arith.constant dense<0.000000e+00> : vector<512x128xf32>
    %16 = tpu.matmul %15, %3, %cst_11 {dimension_numbers = #tpu.dot_dimension_numbers<[1], [0], [0], [1], [0, 0, 1, 1], [], []>} : vector<512x128xbf16>, vector<128x128xbf16>, vector<512x128xf32> -> vector<512x128xf32>
    %17 = vector.broadcast %6 : vector<1x128xf32> to vector<512x128xf32>
    %18 = arith.addf %16, %17 : vector<512x128xf32>
    %cst_12 = arith.constant 0.000000e+00 : f32
    %19 = vector.broadcast %cst_12 : f32 to vector<512x128xf32>
    %20 = arith.maximumf %18, %19 : vector<512x128xf32>
    %cst_13 = arith.constant 6.000000e+00 : f32
    %21 = vector.broadcast %cst_13 : f32 to vector<512x128xf32>
    %22 = arith.minimumf %20, %21 : vector<512x128xf32>
    %23 = arith.truncf %22 : vector<512x128xf32> to vector<512x128xbf16>
    %cst_14 = arith.constant dense<0.000000e+00> : vector<512x128xf32>
    %24 = tpu.matmul %23, %4, %cst_14 {dimension_numbers = #tpu.dot_dimension_numbers<[1], [0], [0], [1], [0, 0, 1, 1], [], []>} : vector<512x128xbf16>, vector<128x128xbf16>, vector<512x128xf32> -> vector<512x128xf32>
    %25 = vector.broadcast %7 : vector<1x128xf32> to vector<512x128xf32>
    %26 = arith.addf %24, %25 : vector<512x128xf32>
    %27 = vector.extract_strided_slice %26 {offsets = [0, 0], sizes = [512, 8], strides = [1, 1]} : vector<512x128xf32> to vector<512x8xf32>
    %c0_15 = arith.constant 0 : index
    %c0_16 = arith.constant 0 : index
    %28 = vector.load %arg4[%c0_15, %c0_16] : memref<512x8xf32, #tpu.memory_space<vmem>>, vector<512x8xf32>
    tpu.vector_store %arg4[%c0_15, %c0_16], %27 {strides = array<i32>} : memref<512x8xf32, #tpu.memory_space<vmem>>, vector<512x8xf32>,
    return
  }
  func.func @transform_0(%arg0: i32) -> (i32, i32) {
    %c0_i32 = arith.constant 0 : i32
    %c0_i32_0 = arith.constant 0 : i32
    return %arg0, %c0_i32 : i32, i32
  }
  func.func @transform_1(%arg0: i32) -> (i32, i32) {
    %c0_i32 = arith.constant 0 : i32
    %c0_i32_0 = arith.constant 0 : i32
    %c0_i32_1 = arith.constant 0 : i32
    return %c0_i32, %c0_i32_0 : i32, i32
  }
  func.func @transform_2(%arg0: i32) -> (i32, i32) {
    %c0_i32 = arith.constant 0 : i32
    %c0_i32_0 = arith.constant 0 : i32
    %c0_i32_1 = arith.constant 0 : i32
    return %c0_i32, %c0_i32_0 : i32, i32
  }
  func.func @transform_3(%arg0: i32) -> (i32, i32) {
    %c0_i32 = arith.constant 0 : i32
    %c0_i32_0 = arith.constant 0 : i32
    return %arg0, %c0_i32 : i32, i32
  }
}

</mosaic_0001>

<llo_original>
// kernel: tpu_custom_call.1
$region0: #{tpu_custom_call.1}
  #allocation0 [shape = 'u32[]', space=smem, size = 0x4, offset = 0x4, fixed_abs, tag = 'smem constant byte address 0x4 - core index']
  #allocation1 [shape = 'u32[144,128]{1,0:T(1,128)}', space=vmem, size = 0x12000, scoped, tag = 'internal scratch']
  %s0 = inlined_call_operand.vmem [shape: f32[512,16], index: 0, kind: input, shape index: {}]
  %s1 = inlined_call_operand.vmem [shape: bf16[272,128], index: 1, kind: input, shape index: {}]
  %s2 = inlined_call_operand.vmem [shape: f32[8,128], index: 2, kind: input, shape index: {}]
  %s3 = inlined_call_operand.vmem [shape: f32[512,8], index: 3, kind: output, shape index: {}]
  %s4 = sld [smem:[#allocation0]]
  $region22: #{tpu_custom_call.1} parent=0
    _
  %s6 = ssub.s32 1, %s4
  %s7 = scalar_select 0, %s6, %s4
  // Predicated region
  $region2: #{tpu_custom_call.1} parent=0 // pred_check
    _
  $region3: #{tpu_custom_call.1} parent=0 // pred_check_branch
    %9 = sbr.rel (0) target = $region5
  $region4: #{tpu_custom_call.1} parent=0 // pred_region
    _
  $region5: #{tpu_custom_call.1} parent=0 // pred_fallthru
    _
  // Predicated region
  $region6: #{tpu_custom_call.1} parent=0 // pred_check
    _
  $region7: #{tpu_custom_call.1} parent=0 // pred_check_branch
    %11 = sbr.rel (0) target = $region9
  $region8: #{tpu_custom_call.1} parent=0 // pred_region
    _
  $region9: #{tpu_custom_call.1} parent=0 // pred_fallthru
    _
  // Predicated region
  $region10: #{tpu_custom_call.1} parent=0 // pred_check
    _
  $region11: #{tpu_custom_call.1} parent=0 // pred_check_branch
    %13 = sbr.rel (0) target = $region13
  $region12: #{tpu_custom_call.1} parent=0 // pred_region
    _
  $region13: #{tpu_custom_call.1} parent=0 // pred_fallthru
    _
  %v15 = vld [vmem:[%s0] sm:$0xff]
  %v16 = vld [vmem:[%s0 + $0x8] sm:$0xff]
  %v17 = vld [vmem:[%s0 + $0x10] sm:$0xff]
  %v18 = vld [vmem:[%s0 + $0x18] sm:$0xff]
  %v19 = vld [vmem:[%s0 + $0x20] sm:$0xff]
  %v20 = vld [vmem:[%s0 + $0x28] sm:$0xff]
  %v21 = vld [vmem:[%s0 + $0x30] sm:$0xff]
  %v22 = vld [vmem:[%s0 + $0x38] sm:$0xff]
  %v23 = vld [vmem:[%s0 + $0x40] sm:$0xff]
  %v24 = vld [vmem:[%s0 + $0x48] sm:$0xff]
  %v25 = vld [vmem:[%s0 + $0x50] sm:$0xff]
  %v26 = vld [vmem:[%s0 + $0x58] sm:$0xff]
  %v27 = vld [vmem:[%s0 + $0x60] sm:$0xff]
  %v28 = vld [vmem:[%s0 + $0x68] sm:$0xff]
  %v29 = vld [vmem:[%s0 + $0x70] sm:$0xff]
  %v30 = vld [vmem:[%s0 + $0x78] sm:$0xff]
  %v31 = vld [vmem:[%s0 + $0x80] sm:$0xff]
  %v32 = vld [vmem:[%s0 + $0x88] sm:$0xff]
  %v33 = vld [vmem:[%s0 + $0x90] sm:$0xff]
  %v34 = vld [vmem:[%s0 + $0x98] sm:$0xff]
  %v35 = vld [vmem:[%s0 + $0xa0] sm:$0xff]
  %v36 = vld [vmem:[%s0 + $0xa8] sm:$0xff]
  %v37 = vld [vmem:[%s0 + $0xb0] sm:$0xff]
  %v38 = vld [vmem:[%s0 + $0xb8] sm:$0xff]
  %v39 = vld [vmem:[%s0 + $0xc0] sm:$0xff]
  %v40 = vld [vmem:[%s0 + $0xc8] sm:$0xff]
  %v41 = vld [vmem:[%s0 + $0xd0] sm:$0xff]
  %v42 = vld [vmem:[%s0 + $0xd8] sm:$0xff]
  %v43 = vld [vmem:[%s0 + $0xe0] sm:$0xff]
  %v44 = vld [vmem:[%s0 + $0xe8] sm:$0xff]
  %v45 = vld [vmem:[%s0 + $0xf0] sm:$0xff]
  %v46 = vld [vmem:[%s0 + $0xf8] sm:$0xff]
  %v47 = vld [vmem:[%s0 + $0x100] sm:$0xff]
  %v48 = vld [vmem:[%s0 + $0x108] sm:$0xff]
  %v49 = vld [vmem:[%s0 + $0x110] sm:$0xff]
  %v50 = vld [vmem:[%s0 + $0x118] sm:$0xff]
  %v51 = vld [vmem:[%s0 + $0x120] sm:$0xff]
  %v52 = vld [vmem:[%s0 + $0x128] sm:$0xff]
  %v53 = vld [vmem:[%s0 + $0x130] sm:$0xff]
  %v54 = vld [vmem:[%s0 + $0x138] sm:$0xff]
  %v55 = vld [vmem:[%s0 + $0x140] sm:$0xff]
  %v56 = vld [vmem:[%s0 + $0x148] sm:$0xff]
  %v57 = vld [vmem:[%s0 + $0x150] sm:$0xff]
  %v58 = vld [vmem:[%s0 + $0x158] sm:$0xff]
  %v59 = vld [vmem:[%s0 + $0x160] sm:$0xff]
  %v60 = vld [vmem:[%s0 + $0x168] sm:$0xff]
  %v61 = vld [vmem:[%s0 + $0x170] sm:$0xff]
  %v62 = vld [vmem:[%s0 + $0x178] sm:$0xff]
  %v63 = vld [vmem:[%s0 + $0x180] sm:$0xff]
  %v64 = vld [vmem:[%s0 + $0x188] sm:$0xff]
  %v65 = vld [vmem:[%s0 + $0x190] sm:$0xff]
  %v66 = vld [vmem:[%s0 + $0x198] sm:$0xff]
  %v67 = vld [vmem:[%s0 + $0x1a0] sm:$0xff]
  %v68 = vld [vmem:[%s0 + $0x1a8] sm:$0xff]
  %v69 = vld [vmem:[%s0 + $0x1b0] sm:$0xff]
  %v70 = vld [vmem:[%s0 + $0x1b8] sm:$0xff]
  %v71 = vld [vmem:[%s0 + $0x1c0] sm:$0xff]
  %v72 = vld [vmem:[%s0 + $0x1c8] sm:$0xff]
  %v73 = vld [vmem:[%s0 + $0x1d0] sm:$0xff]
  %v74 = vld [vmem:[%s0 + $0x1d8] sm:$0xff]
  %v75 = vld [vmem:[%s0 + $0x1e0] sm:$0xff]
  %v76 = vld [vmem:[%s0 + $0x1e8] sm:$0xff]
  %v77 = vld [vmem:[%s0 + $0x1f0] sm:$0xff]
  %v78 = vld [vmem:[%s0 + $0x1f8] sm:$0xff]
  %v79 = vpack.c.bf16 %v16, %v15
  %v80 = vpack.c.bf16 %v18, %v17
  %v81 = vpack.c.bf16 %v20, %v19
  %v82 = vpack.c.bf16 %v22, %v21
  %v83 = vpack.c.bf16 %v24, %v23
  %v84 = vpack.c.bf16 %v26, %v25
  %v85 = vpack.c.bf16 %v28, %v27
  %v86 = vpack.c.bf16 %v30, %v29
  %v87 = vpack.c.bf16 %v32, %v31
  %v88 = vpack.c.bf16 %v34, %v33
  %v89 = vpack.c.bf16 %v36, %v35
  %v90 = vpack.c.bf16 %v38, %v37
  %v91 = vpack.c.bf16 %v40, %v39
  %v92 = vpack.c.bf16 %v42, %v41
  %v93 = vpack.c.bf16 %v44, %v43
  %v94 = vpack.c.bf16 %v46, %v45
  %v95 = vpack.c.bf16 %v48, %v47
  %v96 = vpack.c.bf16 %v50, %v49
  %v97 = vpack.c.bf16 %v52, %v51
  %v98 = vpack.c.bf16 %v54, %v53
  %v99 = vpack.c.bf16 %v56, %v55
  %v100 = vpack.c.bf16 %v58, %v57
  %v101 = vpack.c.bf16 %v60, %v59
  %v102 = vpack.c.bf16 %v62, %v61
  %v103 = vpack.c.bf16 %v64, %v63
  %v104 = vpack.c.bf16 %v66, %v65
  %v105 = vpack.c.bf16 %v68, %v67
  %v106 = vpack.c.bf16 %v70, %v69
  %v107 = vpack.c.bf16 %v72, %v71
  %v108 = vpack.c.bf16 %v74, %v73
  %v109 = vpack.c.bf16 %v76, %v75
  %v110 = vpack.c.bf16 %v78, %v77
  %v111 = vld [vmem:[%s1] sm:$0xf]
  %v112 = vld [vmem:[%s1 + $0x4] sm:$0xf]
  %v113 = vld [vmem:[%s1 + $0x8] sm:$0xf]
  %v114 = vld [vmem:[%s1 + $0xc] sm:$0xf]
  %v115 = vld [vmem:[%s1 + $0x10] sm:$0xf]
  %v116 = vld [vmem:[%s1 + $0x14] sm:$0xf]
  %v117 = vld [vmem:[%s1 + $0x18] sm:$0xf]
  %v118 = vld [vmem:[%s1 + $0x1c] sm:$0xf]
  %v119 = vld [vmem:[%s1 + $0x20] sm:$0xf]
  %v120 = vld [vmem:[%s1 + $0x24] sm:$0xf]
  %v121 = vld [vmem:[%s1 + $0x28] sm:$0xf]
  %v122 = vld [vmem:[%s1 + $0x2c] sm:$0xf]
  %v123 = vld [vmem:[%s1 + $0x30] sm:$0xf]
  %v124 = vld [vmem:[%s1 + $0x34] sm:$0xf]
  %v125 = vld [vmem:[%s1 + $0x38] sm:$0xf]
  %v126 = vld [vmem:[%s1 + $0x3c] sm:$0xf]
  %v127 = vld [vmem:[%s1 + $0x40] sm:$0xf]
  %v128 = vld [vmem:[%s1 + $0x44] sm:$0xf]
  %v129 = vld [vmem:[%s1 + $0x48] sm:$0xf]
  %v130 = vld [vmem:[%s1 + $0x4c] sm:$0xf]
  %v131 = vld [vmem:[%s1 + $0x50] sm:$0xf]
  %v132 = vld [vmem:[%s1 + $0x54] sm:$0xf]
  %v133 = vld [vmem:[%s1 + $0x58] sm:$0xf]
  %v134 = vld [vmem:[%s1 + $0x5c] sm:$0xf]
  %v135 = vld [vmem:[%s1 + $0x60] sm:$0xf]
  %v136 = vld [vmem:[%s1 + $0x64] sm:$0xf]
  %v137 = vld [vmem:[%s1 + $0x68] sm:$0xf]
  %v138 = vld [vmem:[%s1 + $0x6c] sm:$0xf]
  %v139 = vld [vmem:[%s1 + $0x70] sm:$0xf]
  %v140 = vld [vmem:[%s1 + $0x74] sm:$0xf]
  %v141 = vld [vmem:[%s1 + $0x78] sm:$0xf]
  %v142 = vld [vmem:[%s1 + $0x7c] sm:$0xf]
  %v143 = vld [vmem:[%s1 + $0x80] sm:$0xf]
  %v144 = vld [vmem:[%s1 + $0x84] sm:$0xf]
  %v145 = vld [vmem:[%s2] sm:$0x1]
  %v146 = vld [vmem:[%s2 + $0x1] sm:$0x1]
  %v147 = vld [vmem:[%s2 + $0x2] sm:$0x1]
  %v148 = vlaneseq
  %v149 = vshrl.u32 %v148, 7
  %v150 = vsub.s32 0, %v149
  %v151 = vrot.slane %v145, %v150
  %v154 = vunpack.c.l.b16 %v111
  %v155 = vunpack.c.l.b16 %v112
  %v156 = vpack.c.b16 %v155, %v154
  %vm158 = vcmask 130048
  %v160 = vsel %vm158, %v79, 0
  %v163 = vsel %vm158, %v80, 0
  %v166 = vsel %vm158, %v81, 0
  %v169 = vsel %vm158, %v82, 0
  %v172 = vsel %vm158, %v83, 0
  %v175 = vsel %vm158, %v84, 0
  %v178 = vsel %vm158, %v85, 0
  %v181 = vsel %vm158, %v86, 0
  %v184 = vsel %vm158, %v87, 0
  %v187 = vsel %vm158, %v88, 0
  %v190 = vsel %vm158, %v89, 0
  %v193 = vsel %vm158, %v90, 0
  %v196 = vsel %vm158, %v91, 0
  %v199 = vsel %vm158, %v92, 0
  %v202 = vsel %vm158, %v93, 0
  %v205 = vsel %vm158, %v94, 0
  %v208 = vsel %vm158, %v95, 0
  %v211 = vsel %vm158, %v96, 0
  %v214 = vsel %vm158, %v97, 0
  %v217 = vsel %vm158, %v98, 0
  %v220 = vsel %vm158, %v99, 0
  %v223 = vsel %vm158, %v100, 0
  %v226 = vsel %vm158, %v101, 0
  %v229 = vsel %vm158, %v102, 0
  %v232 = vsel %vm158, %v103, 0
  %v235 = vsel %vm158, %v104, 0
  %v238 = vsel %vm158, %v105, 0
  %v241 = vsel %vm158, %v106, 0
  %v244 = vsel %vm158, %v107, 0
  %v247 = vsel %vm158, %v108, 0
  %v250 = vsel %vm158, %v109, 0
  %v253 = vsel %vm158, %v110, 0
  %255 = vmatprep.subr.bf16.mxu0 0
  %256 = vmatpush1.bf16.msra.mxu0 %v156
  %257 = vmatprep.subr.bf16.mxu0 0
  %258 = vmatpush1.bf16.msra.mxu0 0
  %259 = vmatprep.subr.bf16.mxu0 0
  %260 = vmatpush1.bf16.msra.mxu0 0
  %261 = vmatprep.subr.bf16.mxu0 0
  %262 = vmatpush1.bf16.msra.mxu0 0
  %263 = vmatprep.subr.bf16.mxu0 0
  %264 = vmatpush1.bf16.msra.mxu0 0
  %265 = vmatprep.subr.bf16.mxu0 0
  %266 = vmatpush1.bf16.msra.mxu0 0
  %267 = vmatprep.subr.bf16.mxu0 0
  %268 = vmatpush1.bf16.msra.mxu0 0
  %269 = vmatprep.subr.bf16.mxu0 0
  %270 = vmatpush1.bf16.msra.mxu0 0
  %271 = vmatprep.subr.bf16.mxu0 0
  %272 = vmatpush1.bf16.msra.mxu0 0
  %273 = vmatprep.subr.bf16.mxu0 0
  %274 = vmatpush1.bf16.msra.mxu0 0
  %275 = vmatprep.subr.bf16.mxu0 0
  %276 = vmatpush1.bf16.msra.mxu0 0
  %277 = vmatprep.subr.bf16.mxu0 0
  %278 = vmatpush1.bf16.msra.mxu0 0
  %279 = vmatprep.subr.bf16.mxu0 0
  %280 = vmatpush1.bf16.msra.mxu0 0
  %281 = vmatprep.subr.bf16.mxu0 0
  %282 = vmatpush1.bf16.msra.mxu0 0
  %283 = vmatprep.subr.bf16.mxu0 0
  %284 = vmatpush1.bf16.msra.mxu0 0
  %285 = vmatprep.subr.bf16.mxu0 0
  %286 = vmatpush1.bf16.msra.mxu0 0
  %287 = vmatprep.mubr.bf16.mxu0 0
  %288 = vmatmul.mubr.bf16.gmra.mrb[0].mxu0 %v160
  %v289 = vpop.f32.mrb[0].mxu0
  %v290 = vadd.f32 %v151, %v289
  %v291 = vpop.f32.mrb[0].mxu0
  %v292 = vpop.f32.mrb[0].mxu0
  %v293 = vadd.f32 %v151, %v292
  %v294 = vpop.f32.mrb[0].mxu0
  %295 = vmatprep.mubr.bf16.mxu0 0
  %296 = vmatmul.mubr.bf16.gmra.mrb[0].mxu0 %v163
  %v297 = vpop.f32.mrb[0].mxu0
  %v298 = vadd.f32 %v151, %v297
  %v299 = vpop.f32.mrb[0].mxu0
  %v300 = vpop.f32.mrb[0].mxu0
  %v301 = vadd.f32 %v151, %v300
  %v302 = vpop.f32.mrb[0].mxu0
  %303 = vmatprep.mubr.bf16.mxu0 0
  %304 = vmatmul.mubr.bf16.gmra.mrb[0].mxu0 %v166
  %v305 = vpop.f32.mrb[0].mxu0
  %v306 = vadd.f32 %v151, %v305
  %v307 = vpop.f32.mrb[0].mxu0
  %v308 = vpop.f32.mrb[0].mxu0
  %v309 = vadd.f32 %v151, %v308
  %v310 = vpop.f32.mrb[0].mxu0
  %311 = vmatprep.mubr.bf16.mxu0 0
  %312 = vmatmul.mubr.bf16.gmra.mrb[0].mxu0 %v169
  %v313 = vpop.f32.mrb[0].mxu0
  %v314 = vadd.f32 %v151, %v313
  %v315 = vpop.f32.mrb[0].mxu0
  %v316 = vpop.f32.mrb[0].mxu0
  %v317 = vadd.f32 %v151, %v316
  %v318 = vpop.f32.mrb[0].mxu0
  %319 = vmatprep.mubr.bf16.mxu0 0
  %320 = vmatmul.mubr.bf16.gmra.mrb[0].mxu0 %v172
  %v321 = vpop.f32.mrb[0].mxu0
  %v322 = vadd.f32 %v151, %v321
  %v323 = vpop.f32.mrb[0].mxu0
  %v324 = vpop.f32.mrb[0].mxu0
  %v325 = vadd.f32 %v151, %v324
  %v326 = vpop.f32.mrb[0].mxu0
  %327 = vmatprep.mubr.bf16.mxu0 0
  %328 = vmatmul.mubr.bf16.gmra.mrb[0].mxu0 %v175
  %v329 = vpop.f32.mrb[0].mxu0
  %v330 = vadd.f32 %v151, %v329
  %v331 = vpop.f32.mrb[0].mxu0
  %v332 = vpop.f32.mrb[0].mxu0
  %v333 = vadd.f32 %v151, %v332
  %v334 = vpop.f32.mrb[0].mxu0
  %335 = vmatprep.mubr.bf16.mxu0 0
  %336 = vmatmul.mubr.bf16.gmra.mrb[0].mxu0 %v178
  %v337 = vpop.f32.mrb[0].mxu0
  %v338 = vadd.f32 %v151, %v337
  %v339 = vpop.f32.mrb[0].mxu0
  %v340 = vpop.f32.mrb[0].mxu0
  %v341 = vadd.f32 %v151, %v340
  %v342 = vpop.f32.mrb[0].mxu0
  %343 = vmatprep.mubr.bf16.mxu0 0
  %344 = vmatmul.mubr.bf16.gmra.mrb[0].mxu0 %v181
  %v345 = vpop.f32.mrb[0].mxu0
  %v346 = vadd.f32 %v151, %v345
  %v347 = vpop.f32.mrb[0].mxu0
  %v348 = vpop.f32.mrb[0].mxu0
  %v349 = vadd.f32 %v151, %v348
  %v350 = vpop.f32.mrb[0].mxu0
  %351 = vmatprep.mubr.bf16.mxu0 0
  %352 = vmatmul.mubr.bf16.gmra.mrb[0].mxu0 %v184
  %v353 = vpop.f32.mrb[0].mxu0
  %v354 = vadd.f32 %v151, %v353
  %v355 = vpop.f32.mrb[0].mxu0
  %v356 = vpop.f32.mrb[0].mxu0
  %v357 = vadd.f32 %v151, %v356
  %v358 = vpop.f32.mrb[0].mxu0
  %359 = vmatprep.mubr.bf16.mxu0 0
  %360 = vmatmul.mubr.bf16.gmra.mrb[0].mxu0 %v187
  %v361 = vpop.f32.mrb[0].mxu0
  %v362 = vadd.f32 %v151, %v361
  %v363 = vpop.f32.mrb[0].mxu0
  %v364 = vpop.f32.mrb[0].mxu0
  %v365 = vadd.f32 %v151, %v364
  %v366 = vpop.f32.mrb[0].mxu0
  %367 = vmatprep.mubr.bf16.mxu0 0
  %368 = vmatmul.mubr.bf16.gmra.mrb[0].mxu0 %v190
  %v369 = vpop.f32.mrb[0].mxu0
  %v370 = vadd.f32 %v151, %v369
  %v371 = vpop.f32.mrb[0].mxu0
  %v372 = vpop.f32.mrb[0].mxu0
  %v373 = vadd.f32 %v151, %v372
  %v374 = vpop.f32.mrb[0].mxu0
  %375 = vmatprep.mubr.bf16.mxu0 0
  %376 = vmatmul.mubr.bf16.gmra.mrb[0].mxu0 %v193
  %v377 = vpop.f32.mrb[0].mxu0
  %v378 = vadd.f32 %v151, %v377
  %v379 = vpop.f32.mrb[0].mxu0
  %v380 = vpop.f32.mrb[0].mxu0
  %v381 = vadd.f32 %v151, %v380
  %v382 = vpop.f32.mrb[0].mxu0
  %383 = vmatprep.mubr.bf16.mxu0 0
  %384 = vmatmul.mubr.bf16.gmra.mrb[0].mxu0 %v196
  %v385 = vpop.f32.mrb[0].mxu0
  %v386 = vadd.f32 %v151, %v385
  %v387 = vpop.f32.mrb[0].mxu0
  %v388 = vpop.f32.mrb[0].mxu0
  %v389 = vadd.f32 %v151, %v388
  %v390 = vpop.f32.mrb[0].mxu0
  %391 = vmatprep.mubr.bf16.mxu0 0
  %392 = vmatmul.mubr.bf16.gmra.mrb[0].mxu0 %v199
  %v393 = vpop.f32.mrb[0].mxu0
  %v394 = vadd.f32 %v151, %v393
  %v395 = vpop.f32.mrb[0].mxu0
  %v396 = vpop.f32.mrb[0].mxu0
  %v397 = vadd.f32 %v151, %v396
  %v398 = vpop.f32.mrb[0].mxu0
  %399 = vmatprep.mubr.bf16.mxu0 0
  %400 = vmatmul.mubr.bf16.gmra.mrb[0].mxu0 %v202
  %v401 = vpop.f32.mrb[0].mxu0
  %v402 = vadd.f32 %v151, %v401
  %v403 = vpop.f32.mrb[0].mxu0
  %v404 = vpop.f32.mrb[0].mxu0
  %v405 = vadd.f32 %v151, %v404
  %v406 = vpop.f32.mrb[0].mxu0
  %407 = vmatprep.mubr.bf16.mxu0 0
  %408 = vmatmul.mubr.bf16.gmra.mrb[0].mxu0 %v205
  %v409 = vpop.f32.mrb[0].mxu0
  %v410 = vadd.f32 %v151, %v409
  %v411 = vpop.f32.mrb[0].mxu0
  %v412 = vpop.f32.mrb[0].mxu0
  %v413 = vadd.f32 %v151, %v412
  %v414 = vpop.f32.mrb[0].mxu0
  %415 = vmatprep.mubr.bf16.mxu0 0
  %416 = vmatmul.mubr.bf16.gmra.mrb[0].mxu0 %v208
  %v417 = vpop.f32.mrb[0].mxu0
  %v418 = vadd.f32 %v151, %v417
  %v419 = vpop.f32.mrb[0].mxu0
  %v420 = vpop.f32.mrb[0].mxu0
  %v421 = vadd.f32 %v151, %v420
  %v422 = vpop.f32.mrb[0].mxu0
  %423 = vmatprep.mubr.bf16.mxu0 0
  %424 = vmatmul.mubr.bf16.gmra.mrb[0].mxu0 %v211
  %v425 = vpop.f32.mrb[0].mxu0
  %v426 = vadd.f32 %v151, %v425
  %v427 = vpop.f32.mrb[0].mxu0
  %v428 = vpop.f32.mrb[0].mxu0
  %v429 = vadd.f32 %v151, %v428
  %v430 = vpop.f32.mrb[0].mxu0
  %431 = vmatprep.mubr.bf16.mxu0 0
  %432 = vmatmul.mubr.bf16.gmra.mrb[0].mxu0 %v214
  %v433 = vpop.f32.mrb[0].mxu0
  %v434 = vadd.f32 %v151, %v433
  %v435 = vpop.f32.mrb[0].mxu0
  %v436 = vpop.f32.mrb[0].mxu0
  %v437 = vadd.f32 %v151, %v436
  %v438 = vpop.f32.mrb[0].mxu0
  %439 = vmatprep.mubr.bf16.mxu0 0
  %440 = vmatmul.mubr.bf16.gmra.mrb[0].mxu0 %v217
  %v441 = vpop.f32.mrb[0].mxu0
  %v442 = vadd.f32 %v151, %v441
  %v443 = vpop.f32.mrb[0].mxu0
  %v444 = vpop.f32.mrb[0].mxu0
  %v445 = vadd.f32 %v151, %v444
  %v446 = vpop.f32.mrb[0].mxu0
  %447 = vmatprep.mubr.bf16.mxu0 0
  %448 = vmatmul.mubr.bf16.gmra.mrb[0].mxu0 %v220
  %v449 = vpop.f32.mrb[0].mxu0
  %v450 = vadd.f32 %v151, %v449
  %v451 = vpop.f32.mrb[0].mxu0
  %v452 = vpop.f32.mrb[0].mxu0
  %v453 = vadd.f32 %v151, %v452
  %v454 = vpop.f32.mrb[0].mxu0
  %455 = vmatprep.mubr.bf16.mxu0 0
  %456 = vmatmul.mubr.bf16.gmra.mrb[0].mxu0 %v223
  %v457 = vpop.f32.mrb[0].mxu0
  %v458 = vadd.f32 %v151, %v457
  %v459 = vpop.f32.mrb[0].mxu0
  %v460 = vpop.f32.mrb[0].mxu0
  %v461 = vadd.f32 %v151, %v460
  %v462 = vpop.f32.mrb[0].mxu0
  %463 = vmatprep.mubr.bf16.mxu0 0
  %464 = vmatmul.mubr.bf16.gmra.mrb[0].mxu0 %v226
  %v465 = vpop.f32.mrb[0].mxu0
  %v466 = vadd.f32 %v151, %v465
  %v467 = vpop.f32.mrb[0].mxu0
  %v468 = vpop.f32.mrb[0].mxu0
  %v469 = vadd.f32 %v151, %v468
  %v470 = vpop.f32.mrb[0].mxu0
  %471 = vmatprep.mubr.bf16.mxu0 0
  %472 = vmatmul.mubr.bf16.gmra.mrb[0].mxu0 %v229
  %v473 = vpop.f32.mrb[0].mxu0
  %v474 = vadd.f32 %v151, %v473
  %v475 = vpop.f32.mrb[0].mxu0
  %v476 = vpop.f32.mrb[0].mxu0
  %v477 = vadd.f32 %v151, %v476
  %v478 = vpop.f32.mrb[0].mxu0
  %479 = vmatprep.mubr.bf16.mxu0 0
  %480 = vmatmul.mubr.bf16.gmra.mrb[0].mxu0 %v232
  %v481 = vpop.f32.mrb[0].mxu0
  %v482 = vadd.f32 %v151, %v481
  %v483 = vpop.f32.mrb[0].mxu0
  %v484 = vpop.f32.mrb[0].mxu0
  %v485 = vadd.f32 %v151, %v484
  %v486 = vpop.f32.mrb[0].mxu0
  %487 = vmatprep.mubr.bf16.mxu0 0
  %488 = vmatmul.mubr.bf16.gmra.mrb[0].mxu0 %v235
  %v489 = vpop.f32.mrb[0].mxu0
  %v490 = vadd.f32 %v151, %v489
  %v491 = vpop.f32.mrb[0].mxu0
  %v492 = vpop.f32.mrb[0].mxu0
  %v493 = vadd.f32 %v151, %v492
  %v494 = vpop.f32.mrb[0].mxu0
  %495 = vmatprep.mubr.bf16.mxu0 0
  %496 = vmatmul.mubr.bf16.gmra.mrb[0].mxu0 %v238
  %v497 = vpop.f32.mrb[0].mxu0
  %v498 = vadd.f32 %v151, %v497
  %v499 = vpop.f32.mrb[0].mxu0
  %v500 = vpop.f32.mrb[0].mxu0
  %v501 = vadd.f32 %v151, %v500
  %v502 = vpop.f32.mrb[0].mxu0
  %503 = vmatprep.mubr.bf16.mxu0 0
  %504 = vmatmul.mubr.bf16.gmra.mrb[0].mxu0 %v241
  %v505 = vpop.f32.mrb[0].mxu0
  %v506 = vadd.f32 %v151, %v505
  %v507 = vpop.f32.mrb[0].mxu0
  %v508 = vpop.f32.mrb[0].mxu0
  %v509 = vadd.f32 %v151, %v508
  %v510 = vpop.f32.mrb[0].mxu0
  %511 = vmatprep.mubr.bf16.mxu0 0
  %512 = vmatmul.mubr.bf16.gmra.mrb[0].mxu0 %v244
  %v513 = vpop.f32.mrb[0].mxu0
  %v514 = vadd.f32 %v151, %v513
  %v515 = vpop.f32.mrb[0].mxu0
  %v516 = vpop.f32.mrb[0].mxu0
  %v517 = vadd.f32 %v151, %v516
  %v518 = vpop.f32.mrb[0].mxu0
  %519 = vmatprep.mubr.bf16.mxu0 0
  %520 = vmatmul.mubr.bf16.gmra.mrb[0].mxu0 %v247
  %v521 = vpop.f32.mrb[0].mxu0
  %v522 = vadd.f32 %v151, %v521
  %v523 = vpop.f32.mrb[0].mxu0
  %v524 = vpop.f32.mrb[0].mxu0
  %v525 = vadd.f32 %v151, %v524
  %v526 = vpop.f32.mrb[0].mxu0
  %527 = vmatprep.mubr.bf16.mxu0 0
  %528 = vmatmul.mubr.bf16.gmra.mrb[0].mxu0 %v250
  %v529 = vpop.f32.mrb[0].mxu0
  %v530 = vadd.f32 %v151, %v529
  %v531 = vpop.f32.mrb[0].mxu0
  %v532 = vpop.f32.mrb[0].mxu0
  %v533 = vadd.f32 %v151, %v532
  %v534 = vpop.f32.mrb[0].mxu0
  %535 = vmatprep.mubr.bf16.mxu0 0
  %536 = vmatmul.mubr.bf16.gmra.mrb[0].mxu0 %v253
  %v537 = vpop.f32.mrb[0].mxu0
  %v538 = vadd.f32 %v151, %v537
  %v539 = vpop.f32.mrb[0].mxu0
  %v540 = vpop.f32.mrb[0].mxu0
  %v541 = vadd.f32 %v151, %v540
  %v542 = vpop.f32.mrb[0].mxu0
  %543 = vdwg.mxu0
  %v544 = vmax.f32 %v290, 0.0
  %v545 = vmax.f32 %v293, 0.0
  %v546 = vmax.f32 %v298, 0.0
  %v547 = vmax.f32 %v301, 0.0
  %v548 = vmax.f32 %v306, 0.0
  %v549 = vmax.f32 %v309, 0.0
  %v550 = vmax.f32 %v314, 0.0
  %v551 = vmax.f32 %v317, 0.0
  %v552 = vmax.f32 %v322, 0.0
  %v553 = vmax.f32 %v325, 0.0
  %v554 = vmax.f32 %v330, 0.0
  %v555 = vmax.f32 %v333, 0.0
  %v556 = vmax.f32 %v338, 0.0
  %v557 = vmax.f32 %v341, 0.0
  %v558 = vmax.f32 %v346, 0.0
  %v559 = vmax.f32 %v349, 0.0
  %v560 = vmax.f32 %v354, 0.0
  %v561 = vmax.f32 %v357, 0.0
  %v562 = vmax.f32 %v362, 0.0
  %v563 = vmax.f32 %v365, 0.0
  %v564 = vmax.f32 %v370, 0.0
  %v565 = vmax.f32 %v373, 0.0
  %v566 = vmax.f32 %v378, 0.0
  %v567 = vmax.f32 %v381, 0.0
  %v568 = vmax.f32 %v386, 0.0
  %v569 = vmax.f32 %v389, 0.0
  %v570 = vmax.f32 %v394, 0.0
  %v571 = vmax.f32 %v397, 0.0
  %v572 = vmax.f32 %v402, 0.0
  %v573 = vmax.f32 %v405, 0.0
  %v574 = vmax.f32 %v410, 0.0
  %v575 = vmax.f32 %v413, 0.0
  %v576 = vmax.f32 %v418, 0.0
  %v577 = vmax.f32 %v421, 0.0
  %v578 = vmax.f32 %v426, 0.0
  %v579 = vmax.f32 %v429, 0.0
  %v580 = vmax.f32 %v434, 0.0
  %v581 = vmax.f32 %v437, 0.0
  %v582 = vmax.f32 %v442, 0.0
  %v583 = vmax.f32 %v445, 0.0
  %v584 = vmax.f32 %v450, 0.0
  %v585 = vmax.f32 %v453, 0.0
  %v586 = vmax.f32 %v458, 0.0
  %v587 = vmax.f32 %v461, 0.0
  %v588 = vmax.f32 %v466, 0.0
  %v589 = vmax.f32 %v469, 0.0
  %v590 = vmax.f32 %v474, 0.0
  %v591 = vmax.f32 %v477, 0.0
  %v592 = vmax.f32 %v482, 0.0
  %v593 = vmax.f32 %v485, 0.0
  %v594 = vmax.f32 %v490, 0.0
  %v595 = vmax.f32 %v493, 0.0
  %v596 = vmax.f32 %v498, 0.0
  %v597 = vmax.f32 %v501, 0.0
  %v598 = vmax.f32 %v506, 0.0
  %v599 = vmax.f32 %v509, 0.0
  %v600 = vmax.f32 %v514, 0.0
  %v601 = vmax.f32 %v517, 0.0
  %v602 = vmax.f32 %v522, 0.0
  %v603 = vmax.f32 %v525, 0.0
  %v604 = vmax.f32 %v530, 0.0
  %v605 = vmax.f32 %v533, 0.0
  %v606 = vmax.f32 %v538, 0.0
  %v607 = vmax.f32 %v541, 0.0
  %v608 = vmin.f32 %v544, 6.0
  %v609 = vmin.f32 %v545, 6.0
  %v610 = vmin.f32 %v546, 6.0
  %v611 = vmin.f32 %v547, 6.0
  %v612 = vmin.f32 %v548, 6.0
  %v613 = vmin.f32 %v549, 6.0
  %v614 = vmin.f32 %v550, 6.0
  %v615 = vmin.f32 %v551, 6.0
  %v616 = vmin.f32 %v552, 6.0
  %v617 = vmin.f32 %v553, 6.0
  %v618 = vmin.f32 %v554, 6.0
  %v619 = vmin.f32 %v555, 6.0
  %v620 = vmin.f32 %v556, 6.0
  %v621 = vmin.f32 %v557, 6.0
  %v622 = vmin.f32 %v558, 6.0
  %v623 = vmin.f32 %v559, 6.0
  %v624 = vmin.f32 %v560, 6.0
  %v625 = vmin.f32 %v561, 6.0
  %v626 = vmin.f32 %v562, 6.0
  %v627 = vmin.f32 %v563, 6.0
  %v628 = vmin.f32 %v564, 6.0
  %v629 = vmin.f32 %v565, 6.0
  %v630 = vmin.f32 %v566, 6.0
  %v631 = vmin.f32 %v567, 6.0
  %v632 = vmin.f32 %v568, 6.0
  %v633 = vmin.f32 %v569, 6.0
  %v634 = vmin.f32 %v570, 6.0
  %v635 = vmin.f32 %v571, 6.0
  %v636 = vmin.f32 %v572, 6.0
  %v637 = vmin.f32 %v573, 6.0
  %v638 = vmin.f32 %v574, 6.0
  %v639 = vmin.f32 %v575, 6.0
  %v640 = vmin.f32 %v576, 6.0
  %v641 = vmin.f32 %v577, 6.0
  %v642 = vmin.f32 %v578, 6.0
  %v643 = vmin.f32 %v579, 6.0
  %v644 = vmin.f32 %v580, 6.0
  %v645 = vmin.f32 %v581, 6.0
  %v646 = vmin.f32 %v582, 6.0
  %v647 = vmin.f32 %v583, 6.0
  %v648 = vmin.f32 %v584, 6.0
  %v649 = vmin.f32 %v585, 6.0
  %v650 = vmin.f32 %v586, 6.0
  %v651 = vmin.f32 %v587, 6.0
  %v652 = vmin.f32 %v588, 6.0
  %v653 = vmin.f32 %v589, 6.0
  %v654 = vmin.f32 %v590, 6.0
  %v655 = vmin.f32 %v591, 6.0
  %v656 = vmin.f32 %v592, 6.0
  %v657 = vmin.f32 %v593, 6.0
  %v658 = vmin.f32 %v594, 6.0
  %v659 = vmin.f32 %v595, 6.0
  %v660 = vmin.f32 %v596, 6.0
  %v661 = vmin.f32 %v597, 6.0
  %v662 = vmin.f32 %v598, 6.0
  %v663 = vmin.f32 %v599, 6.0
  %v664 = vmin.f32 %v600, 6.0
  %v665 = vmin.f32 %v601, 6.0
  %v666 = vmin.f32 %v602, 6.0
  %v667 = vmin.f32 %v603, 6.0
  %v668 = vmin.f32 %v604, 6.0
  %v669 = vmin.f32 %v605, 6.0
  %v670 = vmin.f32 %v606, 6.0
  %v671 = vmin.f32 %v607, 6.0
  %v672 = vpack.c.bf16 %v609, %v608
  %v673 = vpack.c.bf16 %v611, %v610
  %v674 = vpack.c.bf16 %v613, %v612
  %v675 = vpack.c.bf16 %v615, %v614
  %v676 = vpack.c.bf16 %v617, %v616
  %v677 = vpack.c.bf16 %v619, %v618
  %v678 = vpack.c.bf16 %v621, %v620
  %v679 = vpack.c.bf16 %v623, %v622
  %v680 = vpack.c.bf16 %v625, %v624
  %v681 = vpack.c.bf16 %v627, %v626
  %v682 = vpack.c.bf16 %v629, %v628
  %v683 = vpack.c.bf16 %v631, %v630
  %v684 = vpack.c.bf16 %v633, %v632
  %v685 = vpack.c.bf16 %v635, %v634
  %v686 = vpack.c.bf16 %v637, %v636
  %v687 = vpack.c.bf16 %v639, %v638
  %v688 = vpack.c.bf16 %v641, %v640
  %v689 = vpack.c.bf16 %v643, %v642
  %v690 = vpack.c.bf16 %v645, %v644
  %v691 = vpack.c.bf16 %v647, %v646
  %v692 = vpack.c.bf16 %v649, %v648
  %v693 = vpack.c.bf16 %v651, %v650
  %v694 = vpack.c.bf16 %v653, %v652
  %v695 = vpack.c.bf16 %v655, %v654
  %v696 = vpack.c.bf16 %v657, %v656
  %v697 = vpack.c.bf16 %v659, %v658
  %v698 = vpack.c.bf16 %v661, %v660
  %v699 = vpack.c.bf16 %v663, %v662
  %v700 = vpack.c.bf16 %v665, %v664
  %v701 = vpack.c.bf16 %v667, %v666
  %v702 = vpack.c.bf16 %v669, %v668
  %v703 = vpack.c.bf16 %v671, %v670
  %v704 = vlaneseq
  %v705 = vshrl.u32 %v704, 7
  %v706 = vsub.s32 0, %v705
  %v707 = vrot.slane %v146, %v706
  %v724 = vunpack.c.l.b16 %v113
  %v725 = vunpack.c.l.b16 %v114
  %v726 = vunpack.c.l.b16 %v115
  %v727 = vunpack.c.l.b16 %v116
  %v728 = vunpack.c.l.b16 %v117
  %v729 = vunpack.c.l.b16 %v118
  %v730 = vunpack.c.l.b16 %v119
  %v731 = vunpack.c.l.b16 %v120
  %v732 = vunpack.c.l.b16 %v121
  %v733 = vunpack.c.l.b16 %v122
  %v734 = vunpack.c.l.b16 %v123
  %v735 = vunpack.c.l.b16 %v124
  %v736 = vunpack.c.l.b16 %v125
  %v737 = vunpack.c.l.b16 %v126
  %v738 = vunpack.c.l.b16 %v127
  %v739 = vunpack.c.l.b16 %v128
  %v740 = vpack.c.b16 %v725, %v724
  %v741 = vpack.c.b16 %v727, %v726
  %v742 = vpack.c.b16 %v729, %v728
  %v743 = vpack.c.b16 %v731, %v730
  %v744 = vpack.c.b16 %v733, %v732
  %v745 = vpack.c.b16 %v735, %v734
  %v746 = vpack.c.b16 %v737, %v736
  %v747 = vpack.c.b16 %v739, %v738
  %756 = vmatprep.subr.bf16.mxu0 0
  %757 = vmatpush1.bf16.msra.mxu0 %v740
  %758 = vmatprep.subr.bf16.mxu0 0
  %759 = vmatpush1.bf16.msra.mxu0 %v741
  %760 = vmatprep.subr.bf16.mxu0 0
  %761 = vmatpush1.bf16.msra.mxu0 %v742
  %762 = vmatprep.subr.bf16.mxu0 0
  %763 = vmatpush1.bf16.msra.mxu0 %v743
  %764 = vmatprep.subr.bf16.mxu0 0
  %765 = vmatpush1.bf16.msra.mxu0 %v744
  %766 = vmatprep.subr.bf16.mxu0 0
  %767 = vmatpush1.bf16.msra.mxu0 %v745
  %768 = vmatprep.subr.bf16.mxu0 0
  %769 = vmatpush1.bf16.msra.mxu0 %v746
  %770 = vmatprep.subr.bf16.mxu0 0
  %771 = vmatpush1.bf16.msra.mxu0 %v747
  %772 = vmatprep.subr.bf16.mxu0 0
  %773 = vmatpush1.bf16.msra.mxu0 0
  %774 = vmatprep.subr.bf16.mxu0 0
  %775 = vmatpush1.bf16.msra.mxu0 0
  %776 = vmatprep.subr.bf16.mxu0 0
  %777 = vmatpush1.bf16.msra.mxu0 0
  %778 = vmatprep.subr.bf16.mxu0 0
  %779 = vmatpush1.bf16.msra.mxu0 0
  %780 = vmatprep.subr.bf16.mxu0 0
  %781 = vmatpush1.bf16.msra.mxu0 0
  %782 = vmatprep.subr.bf16.mxu0 0
  %783 = vmatpush1.bf16.msra.mxu0 0
  %784 = vmatprep.subr.bf16.mxu0 0
  %785 = vmatpush1.bf16.msra.mxu0 0
  %786 = vmatprep.subr.bf16.mxu0 0
  %787 = vmatpush1.bf16.msra.mxu0 0
  %788 = vmatprep.mubr.bf16.mxu0 0
  %789 = vmatmul.mubr.bf16.gmra.mrb[0].mxu0 %v672
  %v790 = vpop.f32.mrb[0].mxu0
  %v791 = vadd.f32 %v707, %v790
  %v792 = vpop.f32.mrb[0].mxu0
  %v793 = vpop.f32.mrb[0].mxu0
  %v794 = vadd.f32 %v707, %v793
  %v795 = vpop.f32.mrb[0].mxu0
  %796 = vmatprep.mubr.bf16.mxu0 0
  %797 = vmatmul.mubr.bf16.gmra.mrb[0].mxu0 %v673
  %v798 = vpop.f32.mrb[0].mxu0
  %v799 = vadd.f32 %v707, %v798
  %v800 = vpop.f32.mrb[0].mxu0
  %v801 = vpop.f32.mrb[0].mxu0
  %v802 = vadd.f32 %v707, %v801
  %v803 = vpop.f32.mrb[0].mxu0
  %804 = vmatprep.mubr.bf16.mxu0 0
  %805 = vmatmul.mubr.bf16.gmra.mrb[0].mxu0 %v674
  %v806 = vpop.f32.mrb[0].mxu0
  %v807 = vadd.f32 %v707, %v806
  %v808 = vpop.f32.mrb[0].mxu0
  %v809 = vpop.f32.mrb[0].mxu0
  %v810 = vadd.f32 %v707, %v809
  %v811 = vpop.f32.mrb[0].mxu0
  %812 = vmatprep.mubr.bf16.mxu0 0
  %813 = vmatmul.mubr.bf16.gmra.mrb[0].mxu0 %v675
  %v814 = vpop.f32.mrb[0].mxu0
  %v815 = vadd.f32 %v707, %v814
  %v816 = vpop.f32.mrb[0].mxu0
  %v817 = vpop.f32.mrb[0].mxu0
  %v818 = vadd.f32 %v707, %v817
  %v819 = vpop.f32.mrb[0].mxu0
  %820 = vmatprep.mubr.bf16.mxu0 0
  %821 = vmatmul.mubr.bf16.gmra.mrb[0].mxu0 %v676
  %v822 = vpop.f32.mrb[0].mxu0
  %v823 = vadd.f32 %v707, %v822
  %v824 = vpop.f32.mrb[0].mxu0
  %v825 = vpop.f32.mrb[0].mxu0
  %v826 = vadd.f32 %v707, %v825
  %v827 = vpop.f32.mrb[0].mxu0
  %828 = vmatprep.mubr.bf16.mxu0 0
  %829 = vmatmul.mubr.bf16.gmra.mrb[0].mxu0 %v677
  %v830 = vpop.f32.mrb[0].mxu0
  %v831 = vadd.f32 %v707, %v830
  %v832 = vpop.f32.mrb[0].mxu0
  %v833 = vpop.f32.mrb[0].mxu0
  %v834 = vadd.f32 %v707, %v833
  %v835 = vpop.f32.mrb[0].mxu0
  %836 = vmatprep.mubr.bf16.mxu0 0
  %837 = vmatmul.mubr.bf16.gmra.mrb[0].mxu0 %v678
  %v838 = vpop.f32.mrb[0].mxu0
  %v839 = vadd.f32 %v707, %v838
  %v840 = vpop.f32.mrb[0].mxu0
  %v841 = vpop.f32.mrb[0].mxu0
  %v842 = vadd.f32 %v707, %v841
  %v843 = vpop.f32.mrb[0].mxu0
  %844 = vmatprep.mubr.bf16.mxu0 0
  %845 = vmatmul.mubr.bf16.gmra.mrb[0].mxu0 %v679
  %v846 = vpop.f32.mrb[0].mxu0
  %v847 = vadd.f32 %v707, %v846
  %v848 = vpop.f32.mrb[0].mxu0
  %v849 = vpop.f32.mrb[0].mxu0
  %v850 = vadd.f32 %v707, %v849
  %v851 = vpop.f32.mrb[0].mxu0
  %852 = vmatprep.mubr.bf16.mxu0 0
  %853 = vmatmul.mubr.bf16.gmra.mrb[0].mxu0 %v680
  %v854 = vpop.f32.mrb[0].mxu0
  %v855 = vadd.f32 %v707, %v854
  %v856 = vpop.f32.mrb[0].mxu0
  %v857 = vpop.f32.mrb[0].mxu0
  %v858 = vadd.f32 %v707, %v857
  %v859 = vpop.f32.mrb[0].mxu0
  %860 = vmatprep.mubr.bf16.mxu0 0
  %861 = vmatmul.mubr.bf16.gmra.mrb[0].mxu0 %v681
  %v862 = vpop.f32.mrb[0].mxu0
  %v863 = vadd.f32 %v707, %v862
  %v864 = vpop.f32.mrb[0].mxu0
  %v865 = vpop.f32.mrb[0].mxu0
  %v866 = vadd.f32 %v707, %v865
  %v867 = vpop.f32.mrb[0].mxu0
  %868 = vmatprep.mubr.bf16.mxu0 0
  %869 = vmatmul.mubr.bf16.gmra.mrb[0].mxu0 %v682
  %v870 = vpop.f32.mrb[0].mxu0
  %v871 = vadd.f32 %v707, %v870
  %v872 = vpop.f32.mrb[0].mxu0
  %v873 = vpop.f32.mrb[0].mxu0
  %v874 = vadd.f32 %v707, %v873
  %v875 = vpop.f32.mrb[0].mxu0
  %876 = vmatprep.mubr.bf16.mxu0 0
  %877 = vmatmul.mubr.bf16.gmra.mrb[0].mxu0 %v683
  %v878 = vpop.f32.mrb[0].mxu0
  %v879 = vadd.f32 %v707, %v878
  %v880 = vpop.f32.mrb[0].mxu0
  %v881 = vpop.f32.mrb[0].mxu0
  %v882 = vadd.f32 %v707, %v881
  %v883 = vpop.f32.mrb[0].mxu0
  %884 = vmatprep.mubr.bf16.mxu0 0
  %885 = vmatmul.mubr.bf16.gmra.mrb[0].mxu0 %v684
  %v886 = vpop.f32.mrb[0].mxu0
  %v887 = vadd.f32 %v707, %v886
  %v888 = vpop.f32.mrb[0].mxu0
  %v889 = vpop.f32.mrb[0].mxu0
  %v890 = vadd.f32 %v707, %v889
  %v891 = vpop.f32.mrb[0].mxu0
  %892 = vmatprep.mubr.bf16.mxu0 0
  %893 = vmatmul.mubr.bf16.gmra.mrb[0].mxu0 %v685
  %v894 = vpop.f32.mrb[0].mxu0
  %v895 = vadd.f32 %v707, %v894
  %v896 = vpop.f32.mrb[0].mxu0
  %v897 = vpop.f32.mrb[0].mxu0
  %v898 = vadd.f32 %v707, %v897
  %v899 = vpop.f32.mrb[0].mxu0
  %900 = vmatprep.mubr.bf16.mxu0 0
  %901 = vmatmul.mubr.bf16.gmra.mrb[0].mxu0 %v686
  %v902 = vpop.f32.mrb[0].mxu0
  %v903 = vadd.f32 %v707, %v902
  %v904 = vpop.f32.mrb[0].mxu0
  %v905 = vpop.f32.mrb[0].mxu0
  %v906 = vadd.f32 %v707, %v905
  %v907 = vpop.f32.mrb[0].mxu0
  %908 = vmatprep.mubr.bf16.mxu0 0
  %909 = vmatmul.mubr.bf16.gmra.mrb[0].mxu0 %v687
  %v910 = vpop.f32.mrb[0].mxu0
  %v911 = vadd.f32 %v707, %v910
  %v912 = vpop.f32.mrb[0].mxu0
  %v913 = vpop.f32.mrb[0].mxu0
  %v914 = vadd.f32 %v707, %v913
  %v915 = vpop.f32.mrb[0].mxu0
  %916 = vmatprep.mubr.bf16.mxu0 0
  %917 = vmatmul.mubr.bf16.gmra.mrb[0].mxu0 %v688
  %v918 = vpop.f32.mrb[0].mxu0
  %v919 = vadd.f32 %v707, %v918
  %v920 = vpop.f32.mrb[0].mxu0
  %v921 = vpop.f32.mrb[0].mxu0
  %v922 = vadd.f32 %v707, %v921
  %v923 = vpop.f32.mrb[0].mxu0
  %924 = vmatprep.mubr.bf16.mxu0 0
  %925 = vmatmul.mubr.bf16.gmra.mrb[0].mxu0 %v689
  %v926 = vpop.f32.mrb[0].mxu0
  %v927 = vadd.f32 %v707, %v926
  %v928 = vpop.f32.mrb[0].mxu0
  %v929 = vpop.f32.mrb[0].mxu0
  %v930 = vadd.f32 %v707, %v929
  %v931 = vpop.f32.mrb[0].mxu0
  %932 = vmatprep.mubr.bf16.mxu0 0
  %933 = vmatmul.mubr.bf16.gmra.mrb[0].mxu0 %v690
  %v934 = vpop.f32.mrb[0].mxu0
  %v935 = vadd.f32 %v707, %v934
  %v936 = vpop.f32.mrb[0].mxu0
  %v937 = vpop.f32.mrb[0].mxu0
  %v938 = vadd.f32 %v707, %v937
  %v939 = vpop.f32.mrb[0].mxu0
  %940 = vmatprep.mubr.bf16.mxu0 0
  %941 = vmatmul.mubr.bf16.gmra.mrb[0].mxu0 %v691
  %v942 = vpop.f32.mrb[0].mxu0
  %v943 = vadd.f32 %v707, %v942
  %v944 = vpop.f32.mrb[0].mxu0
  %v945 = vpop.f32.mrb[0].mxu0
  %v946 = vadd.f32 %v707, %v945
  %v947 = vpop.f32.mrb[0].mxu0
  %948 = vmatprep.mubr.bf16.mxu0 0
  %949 = vmatmul.mubr.bf16.gmra.mrb[0].mxu0 %v692
  %v950 = vpop.f32.mrb[0].mxu0
  %v951 = vadd.f32 %v707, %v950
  %v952 = vpop.f32.mrb[0].mxu0
  %v953 = vpop.f32.mrb[0].mxu0
  %v954 = vadd.f32 %v707, %v953
  %v955 = vpop.f32.mrb[0].mxu0
  %956 = vmatprep.mubr.bf16.mxu0 0
  %957 = vmatmul.mubr.bf16.gmra.mrb[0].mxu0 %v693
  %v958 = vpop.f32.mrb[0].mxu0
  %v959 = vadd.f32 %v707, %v958
  %v960 = vpop.f32.mrb[0].mxu0
  %v961 = vpop.f32.mrb[0].mxu0
  %v962 = vadd.f32 %v707, %v961
  %v963 = vpop.f32.mrb[0].mxu0
  %964 = vmatprep.mubr.bf16.mxu0 0
  %965 = vmatmul.mubr.bf16.gmra.mrb[0].mxu0 %v694
  %v966 = vpop.f32.mrb[0].mxu0
  %v967 = vadd.f32 %v707, %v966
  %v968 = vpop.f32.mrb[0].mxu0
  %v969 = vpop.f32.mrb[0].mxu0
  %v970 = vadd.f32 %v707, %v969
  %v971 = vpop.f32.mrb[0].mxu0
  %972 = vmatprep.mubr.bf16.mxu0 0
  %973 = vmatmul.mubr.bf16.gmra.mrb[0].mxu0 %v695
  %v974 = vpop.f32.mrb[0].mxu0
  %v975 = vadd.f32 %v707, %v974
  %v976 = vpop.f32.mrb[0].mxu0
  %v977 = vpop.f32.mrb[0].mxu0
  %v978 = vadd.f32 %v707, %v977
  %v979 = vpop.f32.mrb[0].mxu0
  %980 = vmatprep.mubr.bf16.mxu0 0
  %981 = vmatmul.mubr.bf16.gmra.mrb[0].mxu0 %v696
  %v982 = vpop.f32.mrb[0].mxu0
  %v983 = vadd.f32 %v707, %v982
  %v984 = vpop.f32.mrb[0].mxu0
  %v985 = vpop.f32.mrb[0].mxu0
  %v986 = vadd.f32 %v707, %v985
  %v987 = vpop.f32.mrb[0].mxu0
  %988 = vmatprep.mubr.bf16.mxu0 0
  %989 = vmatmul.mubr.bf16.gmra.mrb[0].mxu0 %v697
  %v990 = vpop.f32.mrb[0].mxu0
  %v991 = vadd.f32 %v707, %v990
  %v992 = vpop.f32.mrb[0].mxu0
  %v993 = vpop.f32.mrb[0].mxu0
  %v994 = vadd.f32 %v707, %v993
  %v995 = vpop.f32.mrb[0].mxu0
  %996 = vmatprep.mubr.bf16.mxu0 0
  %997 = vmatmul.mubr.bf16.gmra.mrb[0].mxu0 %v698
  %v998 = vpop.f32.mrb[0].mxu0
  %v999 = vadd.f32 %v707, %v998
  %v1000 = vpop.f32.mrb[0].mxu0
  %v1001 = vpop.f32.mrb[0].mxu0
  %v1002 = vadd.f32 %v707, %v1001
  %v1003 = vpop.f32.mrb[0].mxu0
  %1004 = vmatprep.mubr.bf16.mxu0 0
  %1005 = vmatmul.mubr.bf16.gmra.mrb[0].mxu0 %v699
  %v1006 = vpop.f32.mrb[0].mxu0
  %v1007 = vadd.f32 %v707, %v1006
  %v1008 = vpop.f32.mrb[0].mxu0
  %v1009 = vpop.f32.mrb[0].mxu0
  %v1010 = vadd.f32 %v707, %v1009
  %v1011 = vpop.f32.mrb[0].mxu0
  %1012 = vmatprep.mubr.bf16.mxu0 0
  %1013 = vmatmul.mubr.bf16.gmra.mrb[0].mxu0 %v700
  %v1014 = vpop.f32.mrb[0].mxu0
  %v1015 = vadd.f32 %v707, %v1014
  %v1016 = vpop.f32.mrb[0].mxu0
  %v1017 = vpop.f32.mrb[0].mxu0
  %v1018 = vadd.f32 %v707, %v1017
  %v1019 = vpop.f32.mrb[0].mxu0
  %1020 = vmatprep.mubr.bf16.mxu0 0
  %1021 = vmatmul.mubr.bf16.gmra.mrb[0].mxu0 %v701
  %v1022 = vpop.f32.mrb[0].mxu0
  %v1023 = vadd.f32 %v707, %v1022
  %v1024 = vpop.f32.mrb[0].mxu0
  %v1025 = vpop.f32.mrb[0].mxu0
  %v1026 = vadd.f32 %v707, %v1025
  %v1027 = vpop.f32.mrb[0].mxu0
  %1028 = vmatprep.mubr.bf16.mxu0 0
  %1029 = vmatmul.mubr.bf16.gmra.mrb[0].mxu0 %v702
  %v1030 = vpop.f32.mrb[0].mxu0
  %v1031 = vadd.f32 %v707, %v1030
  %v1032 = vpop.f32.mrb[0].mxu0
  %v1033 = vpop.f32.mrb[0].mxu0
  %v1034 = vadd.f32 %v707, %v1033
  %v1035 = vpop.f32.mrb[0].mxu0
  %1036 = vmatprep.mubr.bf16.mxu0 0
  %1037 = vmatmul.mubr.bf16.gmra.mrb[0].mxu0 %v703
  %v1038 = vpop.f32.mrb[0].mxu0
  %v1039 = vadd.f32 %v707, %v1038
  %v1040 = vpop.f32.mrb[0].mxu0
  %v1041 = vpop.f32.mrb[0].mxu0
  %v1042 = vadd.f32 %v707, %v1041
  %v1043 = vpop.f32.mrb[0].mxu0
  %1044 = vdwg.mxu0
  %v1045 = vmax.f32 %v791, 0.0
  %v1046 = vmax.f32 %v794, 0.0
  %v1047 = vmax.f32 %v799, 0.0
  %v1048 = vmax.f32 %v802, 0.0
  %v1049 = vmax.f32 %v807, 0.0
  %v1050 = vmax.f32 %v810, 0.0
  %v1051 = vmax.f32 %v815, 0.0
  %v1052 = vmax.f32 %v818, 0.0
  %v1053 = vmax.f32 %v823, 0.0
  %v1054 = vmax.f32 %v826, 0.0
  %v1055 = vmax.f32 %v831, 0.0
  %v1056 = vmax.f32 %v834, 0.0
  %v1057 = vmax.f32 %v839, 0.0
  %v1058 = vmax.f32 %v842, 0.0
  %v1059 = vmax.f32 %v847, 0.0
  %v1060 = vmax.f32 %v850, 0.0
  %v1061 = vmax.f32 %v855, 0.0
  %v1062 = vmax.f32 %v858, 0.0
  %v1063 = vmax.f32 %v863, 0.0
  %v1064 = vmax.f32 %v866, 0.0
  %v1065 = vmax.f32 %v871, 0.0
  %v1066 = vmax.f32 %v874, 0.0
  %v1067 = vmax.f32 %v879, 0.0
  %v1068 = vmax.f32 %v882, 0.0
  %v1069 = vmax.f32 %v887, 0.0
  %v1070 = vmax.f32 %v890, 0.0
  %v1071 = vmax.f32 %v895, 0.0
  %v1072 = vmax.f32 %v898, 0.0
  %v1073 = vmax.f32 %v903, 0.0
  %v1074 = vmax.f32 %v906, 0.0
  %v1075 = vmax.f32 %v911, 0.0
  %v1076 = vmax.f32 %v914, 0.0
  %v1077 = vmax.f32 %v919, 0.0
  %v1078 = vmax.f32 %v922, 0.0
  %v1079 = vmax.f32 %v927, 0.0
  %v1080 = vmax.f32 %v930, 0.0
  %v1081 = vmax.f32 %v935, 0.0
  %v1082 = vmax.f32 %v938, 0.0
  %v1083 = vmax.f32 %v943, 0.0
  %v1084 = vmax.f32 %v946, 0.0
  %v1085 = vmax.f32 %v951, 0.0
  %v1086 = vmax.f32 %v954, 0.0
  %v1087 = vmax.f32 %v959, 0.0
  %v1088 = vmax.f32 %v962, 0.0
  %v1089 = vmax.f32 %v967, 0.0
  %v1090 = vmax.f32 %v970, 0.0
  %v1091 = vmax.f32 %v975, 0.0
  %v1092 = vmax.f32 %v978, 0.0
  %v1093 = vmax.f32 %v983, 0.0
  %v1094 = vmax.f32 %v986, 0.0
  %v1095 = vmax.f32 %v991, 0.0
  %v1096 = vmax.f32 %v994, 0.0
  %v1097 = vmax.f32 %v999, 0.0
  %v1098 = vmax.f32 %v1002, 0.0
  %v1099 = vmax.f32 %v1007, 0.0
  %v1100 = vmax.f32 %v1010, 0.0
  %v1101 = vmax.f32 %v1015, 0.0
  %v1102 = vmax.f32 %v1018, 0.0
  %v1103 = vmax.f32 %v1023, 0.0
  %v1104 = vmax.f32 %v1026, 0.0
  %v1105 = vmax.f32 %v1031, 0.0
  %v1106 = vmax.f32 %v1034, 0.0
  %v1107 = vmax.f32 %v1039, 0.0
  %v1108 = vmax.f32 %v1042, 0.0
  %v1109 = vmin.f32 %v1045, 6.0
  %v1110 = vmin.f32 %v1046, 6.0
  %v1111 = vmin.f32 %v1047, 6.0
  %v1112 = vmin.f32 %v1048, 6.0
  %v1113 = vmin.f32 %v1049, 6.0
  %v1114 = vmin.f32 %v1050, 6.0
  %v1115 = vmin.f32 %v1051, 6.0
  %v1116 = vmin.f32 %v1052, 6.0
  %v1117 = vmin.f32 %v1053, 6.0
  %v1118 = vmin.f32 %v1054, 6.0
  %v1119 = vmin.f32 %v1055, 6.0
  %v1120 = vmin.f32 %v1056, 6.0
  %v1121 = vmin.f32 %v1057, 6.0
  %v1122 = vmin.f32 %v1058, 6.0
  %v1123 = vmin.f32 %v1059, 6.0
  %v1124 = vmin.f32 %v1060, 6.0
  %v1125 = vmin.f32 %v1061, 6.0
  %v1126 = vmin.f32 %v1062, 6.0
  %v1127 = vmin.f32 %v1063, 6.0
  %v1128 = vmin.f32 %v1064, 6.0
  %v1129 = vmin.f32 %v1065, 6.0
  %v1130 = vmin.f32 %v1066, 6.0
  %v1131 = vmin.f32 %v1067, 6.0
  %v1132 = vmin.f32 %v1068, 6.0
  %v1133 = vmin.f32 %v1069, 6.0
  %v1134 = vmin.f32 %v1070, 6.0
  %v1135 = vmin.f32 %v1071, 6.0
  %v1136 = vmin.f32 %v1072, 6.0
  %v1137 = vmin.f32 %v1073, 6.0
  %v1138 = vmin.f32 %v1074, 6.0
  %v1139 = vmin.f32 %v1075, 6.0
  %v1140 = vmin.f32 %v1076, 6.0
  %v1141 = vmin.f32 %v1077, 6.0
  %v1142 = vmin.f32 %v1078, 6.0
  %v1143 = vmin.f32 %v1079, 6.0
  %v1144 = vmin.f32 %v1080, 6.0
  %v1145 = vmin.f32 %v1081, 6.0
  %v1146 = vmin.f32 %v1082, 6.0
  %v1147 = vmin.f32 %v1083, 6.0
  %v1148 = vmin.f32 %v1084, 6.0
  %v1149 = vmin.f32 %v1085, 6.0
  %v1150 = vmin.f32 %v1086, 6.0
  %v1151 = vmin.f32 %v1087, 6.0
  %v1152 = vmin.f32 %v1088, 6.0
  %v1153 = vmin.f32 %v1089, 6.0
  %v1154 = vmin.f32 %v1090, 6.0
  %v1155 = vmin.f32 %v1091, 6.0
  %v1156 = vmin.f32 %v1092, 6.0
  %v1157 = vmin.f32 %v1093, 6.0
  %v1158 = vmin.f32 %v1094, 6.0
  %v1159 = vmin.f32 %v1095, 6.0
  %v1160 = vmin.f32 %v1096, 6.0
  %v1161 = vmin.f32 %v1097, 6.0
  %v1162 = vmin.f32 %v1098, 6.0
  %v1163 = vmin.f32 %v1099, 6.0
  %v1164 = vmin.f32 %v1100, 6.0
  %v1165 = vmin.f32 %v1101, 6.0
  %v1166 = vmin.f32 %v1102, 6.0
  %v1167 = vmin.f32 %v1103, 6.0
  %v1168 = vmin.f32 %v1104, 6.0
  %v1169 = vmin.f32 %v1105, 6.0
  %v1170 = vmin.f32 %v1106, 6.0
  %v1171 = vmin.f32 %v1107, 6.0
  %v1172 = vmin.f32 %v1108, 6.0
  %v1173 = vpack.c.bf16 %v1110, %v1109
  %v1174 = vpack.c.bf16 %v1112, %v1111
  %v1175 = vpack.c.bf16 %v1114, %v1113
  %v1176 = vpack.c.bf16 %v1116, %v1115
  %v1177 = vpack.c.bf16 %v1118, %v1117
  %v1178 = vpack.c.bf16 %v1120, %v1119
  %v1179 = vpack.c.bf16 %v1122, %v1121
  %v1180 = vpack.c.bf16 %v1124, %v1123
  %v1181 = vpack.c.bf16 %v1126, %v1125
  %v1182 = vpack.c.bf16 %v1128, %v1127
  %v1183 = vpack.c.bf16 %v1130, %v1129
  %v1184 = vpack.c.bf16 %v1132, %v1131
  %v1185 = vpack.c.bf16 %v1134, %v1133
  %v1186 = vpack.c.bf16 %v1136, %v1135
  %v1187 = vpack.c.bf16 %v1138, %v1137
  %v1188 = vpack.c.bf16 %v1140, %v1139
  %v1189 = vpack.c.bf16 %v1142, %v1141
  %v1190 = vpack.c.bf16 %v1144, %v1143
  %v1191 = vpack.c.bf16 %v1146, %v1145
  %v1192 = vpack.c.bf16 %v1148, %v1147
  %v1193 = vpack.c.bf16 %v1150, %v1149
  %v1194 = vpack.c.bf16 %v1152, %v1151
  %v1195 = vpack.c.bf16 %v1154, %v1153
  %v1196 = vpack.c.bf16 %v1156, %v1155
  %v1197 = vpack.c.bf16 %v1158, %v1157
  %v1198 = vpack.c.bf16 %v1160, %v1159
  %v1199 = vpack.c.bf16 %v1162, %v1161
  %v1200 = vpack.c.bf16 %v1164, %v1163
  %v1201 = vpack.c.bf16 %v1166, %v1165
  %v1202 = vpack.c.bf16 %v1168, %v1167
  %v1203 = vpack.c.bf16 %v1170, %v1169
  %v1204 = vpack.c.bf16 %v1172, %v1171
  %v1205 = vlaneseq
  %v1206 = vshrl.u32 %v1205, 7
  %v1207 = vsub.s32 0, %v1206
  %v1208 = vrot.slane %v147, %v1207
  %v1225 = vunpack.c.l.b16 %v129
  %v1226 = vunpack.c.l.b16 %v130
  %v1227 = vunpack.c.l.b16 %v131
  %v1228 = vunpack.c.l.b16 %v132
  %v1229 = vunpack.c.l.b16 %v133
  %v1230 = vunpack.c.l.b16 %v134
  %v1231 = vunpack.c.l.b16 %v135
  %v1232 = vunpack.c.l.b16 %v136
  %v1233 = vunpack.c.l.b16 %v137
  %v1234 = vunpack.c.l.b16 %v138
  %v1235 = vunpack.c.l.b16 %v139
  %v1236 = vunpack.c.l.b16 %v140
  %v1237 = vunpack.c.l.b16 %v141
  %v1238 = vunpack.c.l.b16 %v142
  %v1239 = vunpack.c.l.b16 %v143
  %v1240 = vunpack.c.l.b16 %v144
  %v1241 = vpack.c.b16 %v1226, %v1225
  %v1242 = vpack.c.b16 %v1228, %v1227
  %v1243 = vpack.c.b16 %v1230, %v1229
  %v1244 = vpack.c.b16 %v1232, %v1231
  %v1245 = vpack.c.b16 %v1234, %v1233
  %v1246 = vpack.c.b16 %v1236, %v1235
  %v1247 = vpack.c.b16 %v1238, %v1237
  %v1248 = vpack.c.b16 %v1240, %v1239
  %1257 = vmatprep.subr.bf16.mxu0 0
  %1258 = vmatpush1.bf16.msra.mxu0 %v1241
  %1259 = vmatprep.subr.bf16.mxu0 0
  %1260 = vmatpush1.bf16.msra.mxu0 %v1242
  %1261 = vmatprep.subr.bf16.mxu0 0
  %1262 = vmatpush1.bf16.msra.mxu0 %v1243
  %1263 = vmatprep.subr.bf16.mxu0 0
  %1264 = vmatpush1.bf16.msra.mxu0 %v1244
  %1265 = vmatprep.subr.bf16.mxu0 0
  %1266 = vmatpush1.bf16.msra.mxu0 %v1245
  %1267 = vmatprep.subr.bf16.mxu0 0
  %1268 = vmatpush1.bf16.msra.mxu0 %v1246
  %1269 = vmatprep.subr.bf16.mxu0 0
  %1270 = vmatpush1.bf16.msra.mxu0 %v1247
  %1271 = vmatprep.subr.bf16.mxu0 0
  %1272 = vmatpush1.bf16.msra.mxu0 %v1248
  %1273 = vmatprep.subr.bf16.mxu0 0
  %1274 = vmatpush1.bf16.msra.mxu0 0
  %1275 = vmatprep.subr.bf16.mxu0 0
  %1276 = vmatpush1.bf16.msra.mxu0 0
  %1277 = vmatprep.subr.bf16.mxu0 0
  %1278 = vmatpush1.bf16.msra.mxu0 0
  %1279 = vmatprep.subr.bf16.mxu0 0
  %1280 = vmatpush1.bf16.msra.mxu0 0
  %1281 = vmatprep.subr.bf16.mxu0 0
  %1282 = vmatpush1.bf16.msra.mxu0 0
  %1283 = vmatprep.subr.bf16.mxu0 0
  %1284 = vmatpush1.bf16.msra.mxu0 0
  %1285 = vmatprep.subr.bf16.mxu0 0
  %1286 = vmatpush1.bf16.msra.mxu0 0
  %1287 = vmatprep.subr.bf16.mxu0 0
  %1288 = vmatpush1.bf16.msra.mxu0 0
  %1289 = vmatprep.mubr.bf16.mxu0 0
  %1290 = vmatmul.mubr.bf16.gmra.mrb[0].mxu0 %v1173
  %v1291 = vpop.f32.mrb[0].mxu0
  %v1292 = vadd.f32 %v1208, %v1291
  %v1293 = vpop.f32.mrb[0].mxu0
  %v1294 = vpop.f32.mrb[0].mxu0
  %v1295 = vadd.f32 %v1208, %v1294
  %v1296 = vpop.f32.mrb[0].mxu0
  %1297 = vmatprep.mubr.bf16.mxu0 0
  %1298 = vmatmul.mubr.bf16.gmra.mrb[0].mxu0 %v1174
  %v1299 = vpop.f32.mrb[0].mxu0
  %v1300 = vadd.f32 %v1208, %v1299
  %v1301 = vpop.f32.mrb[0].mxu0
  %v1302 = vpop.f32.mrb[0].mxu0
  %v1303 = vadd.f32 %v1208, %v1302
  %v1304 = vpop.f32.mrb[0].mxu0
  %1305 = vmatprep.mubr.bf16.mxu0 0
  %1306 = vmatmul.mubr.bf16.gmra.mrb[0].mxu0 %v1175
  %v1307 = vpop.f32.mrb[0].mxu0
  %v1308 = vadd.f32 %v1208, %v1307
  %v1309 = vpop.f32.mrb[0].mxu0
  %v1310 = vpop.f32.mrb[0].mxu0
  %v1311 = vadd.f32 %v1208, %v1310
  %v1312 = vpop.f32.mrb[0].mxu0
  %1313 = vmatprep.mubr.bf16.mxu0 0
  %1314 = vmatmul.mubr.bf16.gmra.mrb[0].mxu0 %v1176
  %v1315 = vpop.f32.mrb[0].mxu0
  %v1316 = vadd.f32 %v1208, %v1315
  %v1317 = vpop.f32.mrb[0].mxu0
  %v1318 = vpop.f32.mrb[0].mxu0
  %v1319 = vadd.f32 %v1208, %v1318
  %v1320 = vpop.f32.mrb[0].mxu0
  %1321 = vmatprep.mubr.bf16.mxu0 0
  %1322 = vmatmul.mubr.bf16.gmra.mrb[0].mxu0 %v1177
  %v1323 = vpop.f32.mrb[0].mxu0
  %v1324 = vadd.f32 %v1208, %v1323
  %v1325 = vpop.f32.mrb[0].mxu0
  %v1326 = vpop.f32.mrb[0].mxu0
  %v1327 = vadd.f32 %v1208, %v1326
  %v1328 = vpop.f32.mrb[0].mxu0
  %1329 = vmatprep.mubr.bf16.mxu0 0
  %1330 = vmatmul.mubr.bf16.gmra.mrb[0].mxu0 %v1178
  %v1331 = vpop.f32.mrb[0].mxu0
  %v1332 = vadd.f32 %v1208, %v1331
  %v1333 = vpop.f32.mrb[0].mxu0
  %v1334 = vpop.f32.mrb[0].mxu0
  %v1335 = vadd.f32 %v1208, %v1334
  %v1336 = vpop.f32.mrb[0].mxu0
  %1337 = vmatprep.mubr.bf16.mxu0 0
  %1338 = vmatmul.mubr.bf16.gmra.mrb[0].mxu0 %v1179
  %v1339 = vpop.f32.mrb[0].mxu0
  %v1340 = vadd.f32 %v1208, %v1339
  %v1341 = vpop.f32.mrb[0].mxu0
  %v1342 = vpop.f32.mrb[0].mxu0
  %v1343 = vadd.f32 %v1208, %v1342
  %v1344 = vpop.f32.mrb[0].mxu0
  %1345 = vmatprep.mubr.bf16.mxu0 0
  %1346 = vmatmul.mubr.bf16.gmra.mrb[0].mxu0 %v1180
  %v1347 = vpop.f32.mrb[0].mxu0
  %v1348 = vadd.f32 %v1208, %v1347
  %v1349 = vpop.f32.mrb[0].mxu0
  %v1350 = vpop.f32.mrb[0].mxu0
  %v1351 = vadd.f32 %v1208, %v1350
  %v1352 = vpop.f32.mrb[0].mxu0
  %1353 = vmatprep.mubr.bf16.mxu0 0
  %1354 = vmatmul.mubr.bf16.gmra.mrb[0].mxu0 %v1181
  %v1355 = vpop.f32.mrb[0].mxu0
  %v1356 = vadd.f32 %v1208, %v1355
  %v1357 = vpop.f32.mrb[0].mxu0
  %v1358 = vpop.f32.mrb[0].mxu0
  %v1359 = vadd.f32 %v1208, %v1358
  %v1360 = vpop.f32.mrb[0].mxu0
  %1361 = vmatprep.mubr.bf16.mxu0 0
  %1362 = vmatmul.mubr.bf16.gmra.mrb[0].mxu0 %v1182
  %v1363 = vpop.f32.mrb[0].mxu0
  %v1364 = vadd.f32 %v1208, %v1363
  %v1365 = vpop.f32.mrb[0].mxu0
  %v1366 = vpop.f32.mrb[0].mxu0
  %v1367 = vadd.f32 %v1208, %v1366
  %v1368 = vpop.f32.mrb[0].mxu0
  %1369 = vmatprep.mubr.bf16.mxu0 0
  %1370 = vmatmul.mubr.bf16.gmra.mrb[0].mxu0 %v1183
  %v1371 = vpop.f32.mrb[0].mxu0
  %v1372 = vadd.f32 %v1208, %v1371
  %v1373 = vpop.f32.mrb[0].mxu0
  %v1374 = vpop.f32.mrb[0].mxu0
  %v1375 = vadd.f32 %v1208, %v1374
  %v1376 = vpop.f32.mrb[0].mxu0
  %1377 = vmatprep.mubr.bf16.mxu0 0
  %1378 = vmatmul.mubr.bf16.gmra.mrb[0].mxu0 %v1184
  %v1379 = vpop.f32.mrb[0].mxu0
  %v1380 = vadd.f32 %v1208, %v1379
  %v1381 = vpop.f32.mrb[0].mxu0
  %v1382 = vpop.f32.mrb[0].mxu0
  %v1383 = vadd.f32 %v1208, %v1382
  %v1384 = vpop.f32.mrb[0].mxu0
  %1385 = vmatprep.mubr.bf16.mxu0 0
  %1386 = vmatmul.mubr.bf16.gmra.mrb[0].mxu0 %v1185
  %v1387 = vpop.f32.mrb[0].mxu0
  %v1388 = vadd.f32 %v1208, %v1387
  %v1389 = vpop.f32.mrb[0].mxu0
  %v1390 = vpop.f32.mrb[0].mxu0
  %v1391 = vadd.f32 %v1208, %v1390
  %v1392 = vpop.f32.mrb[0].mxu0
  %1393 = vmatprep.mubr.bf16.mxu0 0
  %1394 = vmatmul.mubr.bf16.gmra.mrb[0].mxu0 %v1186
  %v1395 = vpop.f32.mrb[0].mxu0
  %v1396 = vadd.f32 %v1208, %v1395
  %v1397 = vpop.f32.mrb[0].mxu0
  %v1398 = vpop.f32.mrb[0].mxu0
  %v1399 = vadd.f32 %v1208, %v1398
  %v1400 = vpop.f32.mrb[0].mxu0
  %1401 = vmatprep.mubr.bf16.mxu0 0
  %1402 = vmatmul.mubr.bf16.gmra.mrb[0].mxu0 %v1187
  %v1403 = vpop.f32.mrb[0].mxu0
  %v1404 = vadd.f32 %v1208, %v1403
  %v1405 = vpop.f32.mrb[0].mxu0
  %v1406 = vpop.f32.mrb[0].mxu0
  %v1407 = vadd.f32 %v1208, %v1406
  %v1408 = vpop.f32.mrb[0].mxu0
  %1409 = vmatprep.mubr.bf16.mxu0 0
  %1410 = vmatmul.mubr.bf16.gmra.mrb[0].mxu0 %v1188
  %v1411 = vpop.f32.mrb[0].mxu0
  %v1412 = vadd.f32 %v1208, %v1411
  %v1413 = vpop.f32.mrb[0].mxu0
  %v1414 = vpop.f32.mrb[0].mxu0
  %v1415 = vadd.f32 %v1208, %v1414
  %v1416 = vpop.f32.mrb[0].mxu0
  %1417 = vmatprep.mubr.bf16.mxu0 0
  %1418 = vmatmul.mubr.bf16.gmra.mrb[0].mxu0 %v1189
  %v1419 = vpop.f32.mrb[0].mxu0
  %v1420 = vadd.f32 %v1208, %v1419
  %v1421 = vpop.f32.mrb[0].mxu0
  %v1422 = vpop.f32.mrb[0].mxu0
  %v1423 = vadd.f32 %v1208, %v1422
  %v1424 = vpop.f32.mrb[0].mxu0
  %1425 = vmatprep.mubr.bf16.mxu0 0
  %1426 = vmatmul.mubr.bf16.gmra.mrb[0].mxu0 %v1190
  %v1427 = vpop.f32.mrb[0].mxu0
  %v1428 = vadd.f32 %v1208, %v1427
  %v1429 = vpop.f32.mrb[0].mxu0
  %v1430 = vpop.f32.mrb[0].mxu0
  %v1431 = vadd.f32 %v1208, %v1430
  %v1432 = vpop.f32.mrb[0].mxu0
  %1433 = vmatprep.mubr.bf16.mxu0 0
  %1434 = vmatmul.mubr.bf16.gmra.mrb[0].mxu0 %v1191
  %v1435 = vpop.f32.mrb[0].mxu0
  %v1436 = vadd.f32 %v1208, %v1435
  %v1437 = vpop.f32.mrb[0].mxu0
  %v1438 = vpop.f32.mrb[0].mxu0
  %v1439 = vadd.f32 %v1208, %v1438
  %v1440 = vpop.f32.mrb[0].mxu0
  %1441 = vmatprep.mubr.bf16.mxu0 0
  %1442 = vmatmul.mubr.bf16.gmra.mrb[0].mxu0 %v1192
  %v1443 = vpop.f32.mrb[0].mxu0
  %v1444 = vadd.f32 %v1208, %v1443
  %v1445 = vpop.f32.mrb[0].mxu0
  %v1446 = vpop.f32.mrb[0].mxu0
  %v1447 = vadd.f32 %v1208, %v1446
  %v1448 = vpop.f32.mrb[0].mxu0
  %1449 = vmatprep.mubr.bf16.mxu0 0
  %1450 = vmatmul.mubr.bf16.gmra.mrb[0].mxu0 %v1193
  %v1451 = vpop.f32.mrb[0].mxu0
  %v1452 = vadd.f32 %v1208, %v1451
  %v1453 = vpop.f32.mrb[0].mxu0
  %v1454 = vpop.f32.mrb[0].mxu0
  %v1455 = vadd.f32 %v1208, %v1454
  %v1456 = vpop.f32.mrb[0].mxu0
  %1457 = vmatprep.mubr.bf16.mxu0 0
  %1458 = vmatmul.mubr.bf16.gmra.mrb[0].mxu0 %v1194
  %v1459 = vpop.f32.mrb[0].mxu0
  %v1460 = vadd.f32 %v1208, %v1459
  %v1461 = vpop.f32.mrb[0].mxu0
  %v1462 = vpop.f32.mrb[0].mxu0
  %v1463 = vadd.f32 %v1208, %v1462
  %v1464 = vpop.f32.mrb[0].mxu0
  %1465 = vmatprep.mubr.bf16.mxu0 0
  %1466 = vmatmul.mubr.bf16.gmra.mrb[0].mxu0 %v1195
  %v1467 = vpop.f32.mrb[0].mxu0
  %v1468 = vadd.f32 %v1208, %v1467
  %v1469 = vpop.f32.mrb[0].mxu0
  %v1470 = vpop.f32.mrb[0].mxu0
  %v1471 = vadd.f32 %v1208, %v1470
  %v1472 = vpop.f32.mrb[0].mxu0
  %1473 = vmatprep.mubr.bf16.mxu0 0
  %1474 = vmatmul.mubr.bf16.gmra.mrb[0].mxu0 %v1196
  %v1475 = vpop.f32.mrb[0].mxu0
  %v1476 = vadd.f32 %v1208, %v1475
  %v1477 = vpop.f32.mrb[0].mxu0
  %v1478 = vpop.f32.mrb[0].mxu0
  %v1479 = vadd.f32 %v1208, %v1478
  %v1480 = vpop.f32.mrb[0].mxu0
  %1481 = vmatprep.mubr.bf16.mxu0 0
  %1482 = vmatmul.mubr.bf16.gmra.mrb[0].mxu0 %v1197
  %v1483 = vpop.f32.mrb[0].mxu0
  %v1484 = vadd.f32 %v1208, %v1483
  %v1485 = vpop.f32.mrb[0].mxu0
  %v1486 = vpop.f32.mrb[0].mxu0
  %v1487 = vadd.f32 %v1208, %v1486
  %v1488 = vpop.f32.mrb[0].mxu0
  %1489 = vmatprep.mubr.bf16.mxu0 0
  %1490 = vmatmul.mubr.bf16.gmra.mrb[0].mxu0 %v1198
  %v1491 = vpop.f32.mrb[0].mxu0
  %v1492 = vadd.f32 %v1208, %v1491
  %v1493 = vpop.f32.mrb[0].mxu0
  %v1494 = vpop.f32.mrb[0].mxu0
  %v1495 = vadd.f32 %v1208, %v1494
  %v1496 = vpop.f32.mrb[0].mxu0
  %1497 = vmatprep.mubr.bf16.mxu0 0
  %1498 = vmatmul.mubr.bf16.gmra.mrb[0].mxu0 %v1199
  %v1499 = vpop.f32.mrb[0].mxu0
  %v1500 = vadd.f32 %v1208, %v1499
  %v1501 = vpop.f32.mrb[0].mxu0
  %v1502 = vpop.f32.mrb[0].mxu0
  %v1503 = vadd.f32 %v1208, %v1502
  %v1504 = vpop.f32.mrb[0].mxu0
  %1505 = vmatprep.mubr.bf16.mxu0 0
  %1506 = vmatmul.mubr.bf16.gmra.mrb[0].mxu0 %v1200
  %v1507 = vpop.f32.mrb[0].mxu0
  %v1508 = vadd.f32 %v1208, %v1507
  %v1509 = vpop.f32.mrb[0].mxu0
  %v1510 = vpop.f32.mrb[0].mxu0
  %v1511 = vadd.f32 %v1208, %v1510
  %v1512 = vpop.f32.mrb[0].mxu0
  %1513 = vmatprep.mubr.bf16.mxu0 0
  %1514 = vmatmul.mubr.bf16.gmra.mrb[0].mxu0 %v1201
  %v1515 = vpop.f32.mrb[0].mxu0
  %v1516 = vadd.f32 %v1208, %v1515
  %v1517 = vpop.f32.mrb[0].mxu0
  %v1518 = vpop.f32.mrb[0].mxu0
  %v1519 = vadd.f32 %v1208, %v1518
  %v1520 = vpop.f32.mrb[0].mxu0
  %1521 = vmatprep.mubr.bf16.mxu0 0
  %1522 = vmatmul.mubr.bf16.gmra.mrb[0].mxu0 %v1202
  %v1523 = vpop.f32.mrb[0].mxu0
  %v1524 = vadd.f32 %v1208, %v1523
  %v1525 = vpop.f32.mrb[0].mxu0
  %v1526 = vpop.f32.mrb[0].mxu0
  %v1527 = vadd.f32 %v1208, %v1526
  %v1528 = vpop.f32.mrb[0].mxu0
  %1529 = vmatprep.mubr.bf16.mxu0 0
  %1530 = vmatmul.mubr.bf16.gmra.mrb[0].mxu0 %v1203
  %v1531 = vpop.f32.mrb[0].mxu0
  %v1532 = vadd.f32 %v1208, %v1531
  %v1533 = vpop.f32.mrb[0].mxu0
  %v1534 = vpop.f32.mrb[0].mxu0
  %v1535 = vadd.f32 %v1208, %v1534
  %v1536 = vpop.f32.mrb[0].mxu0
  %1537 = vmatprep.mubr.bf16.mxu0 0
  %1538 = vmatmul.mubr.bf16.gmra.mrb[0].mxu0 %v1204
  %v1539 = vpop.f32.mrb[0].mxu0
  %v1540 = vadd.f32 %v1208, %v1539
  %v1541 = vpop.f32.mrb[0].mxu0
  %v1542 = vpop.f32.mrb[0].mxu0
  %v1543 = vadd.f32 %v1208, %v1542
  %v1544 = vpop.f32.mrb[0].mxu0
  %1545 = vdwg.mxu0
  %vm1546 = vcmask 64512
  %1547 = vst.msk [vmem:[%s3] sm:$0xff] %vm1546, %v1292
  %1548 = vst.msk [vmem:[%s3 + $0x8] sm:$0xff] %vm1546, %v1295
  %1549 = vst.msk [vmem:[%s3 + $0x10] sm:$0xff] %vm1546, %v1300
  %1550 = vst.msk [vmem:[%s3 + $0x18] sm:$0xff] %vm1546, %v1303
  %1551 = vst.msk [vmem:[%s3 + $0x20] sm:$0xff] %vm1546, %v1308
  %1552 = vst.msk [vmem:[%s3 + $0x28] sm:$0xff] %vm1546, %v1311
  %1553 = vst.msk [vmem:[%s3 + $0x30] sm:$0xff] %vm1546, %v1316
  %1554 = vst.msk [vmem:[%s3 + $0x38] sm:$0xff] %vm1546, %v1319
  %1555 = vst.msk [vmem:[%s3 + $0x40] sm:$0xff] %vm1546, %v1324
  %1556 = vst.msk [vmem:[%s3 + $0x48] sm:$0xff] %vm1546, %v1327
  %1557 = vst.msk [vmem:[%s3 + $0x50] sm:$0xff] %vm1546, %v1332
  %1558 = vst.msk [vmem:[%s3 + $0x58] sm:$0xff] %vm1546, %v1335
  %1559 = vst.msk [vmem:[%s3 + $0x60] sm:$0xff] %vm1546, %v1340
  %1560 = vst.msk [vmem:[%s3 + $0x68] sm:$0xff] %vm1546, %v1343
  %1561 = vst.msk [vmem:[%s3 + $0x70] sm:$0xff] %vm1546, %v1348
  %1562 = vst.msk [vmem:[%s3 + $0x78] sm:$0xff] %vm1546, %v1351
  %1563 = vst.msk [vmem:[%s3 + $0x80] sm:$0xff] %vm1546, %v1356
  %1564 = vst.msk [vmem:[%s3 + $0x88] sm:$0xff] %vm1546, %v1359
  %1565 = vst.msk [vmem:[%s3 + $0x90] sm:$0xff] %vm1546, %v1364
  %1566 = vst.msk [vmem:[%s3 + $0x98] sm:$0xff] %vm1546, %v1367
  %1567 = vst.msk [vmem:[%s3 + $0xa0] sm:$0xff] %vm1546, %v1372
  %1568 = vst.msk [vmem:[%s3 + $0xa8] sm:$0xff] %vm1546, %v1375
  %1569 = vst.msk [vmem:[%s3 + $0xb0] sm:$0xff] %vm1546, %v1380
  %1570 = vst.msk [vmem:[%s3 + $0xb8] sm:$0xff] %vm1546, %v1383
  %1571 = vst.msk [vmem:[%s3 + $0xc0] sm:$0xff] %vm1546, %v1388
  %1572 = vst.msk [vmem:[%s3 + $0xc8] sm:$0xff] %vm1546, %v1391
  %1573 = vst.msk [vmem:[%s3 + $0xd0] sm:$0xff] %vm1546, %v1396
  %1574 = vst.msk [vmem:[%s3 + $0xd8] sm:$0xff] %vm1546, %v1399
  %1575 = vst.msk [vmem:[%s3 + $0xe0] sm:$0xff] %vm1546, %v1404
  %1576 = vst.msk [vmem:[%s3 + $0xe8] sm:$0xff] %vm1546, %v1407
  %1577 = vst.msk [vmem:[%s3 + $0xf0] sm:$0xff] %vm1546, %v1412
  %1578 = vst.msk [vmem:[%s3 + $0xf8] sm:$0xff] %vm1546, %v1415
  %1579 = vst.msk [vmem:[%s3 + $0x100] sm:$0xff] %vm1546, %v1420
  %1580 = vst.msk [vmem:[%s3 + $0x108] sm:$0xff] %vm1546, %v1423
  %1581 = vst.msk [vmem:[%s3 + $0x110] sm:$0xff] %vm1546, %v1428
  %1582 = vst.msk [vmem:[%s3 + $0x118] sm:$0xff] %vm1546, %v1431
  %1583 = vst.msk [vmem:[%s3 + $0x120] sm:$0xff] %vm1546, %v1436
  %1584 = vst.msk [vmem:[%s3 + $0x128] sm:$0xff] %vm1546, %v1439
  %1585 = vst.msk [vmem:[%s3 + $0x130] sm:$0xff] %vm1546, %v1444
  %1586 = vst.msk [vmem:[%s3 + $0x138] sm:$0xff] %vm1546, %v1447
  %1587 = vst.msk [vmem:[%s3 + $0x140] sm:$0xff] %vm1546, %v1452
  %1588 = vst.msk [vmem:[%s3 + $0x148] sm:$0xff] %vm1546, %v1455
  %1589 = vst.msk [vmem:[%s3 + $0x150] sm:$0xff] %vm1546, %v1460
  %1590 = vst.msk [vmem:[%s3 + $0x158] sm:$0xff] %vm1546, %v1463
  %1591 = vst.msk [vmem:[%s3 + $0x160] sm:$0xff] %vm1546, %v1468
  %1592 = vst.msk [vmem:[%s3 + $0x168] sm:$0xff] %vm1546, %v1471
  %1593 = vst.msk [vmem:[%s3 + $0x170] sm:$0xff] %vm1546, %v1476
  %1594 = vst.msk [vmem:[%s3 + $0x178] sm:$0xff] %vm1546, %v1479
  %1595 = vst.msk [vmem:[%s3 + $0x180] sm:$0xff] %vm1546, %v1484
  %1596 = vst.msk [vmem:[%s3 + $0x188] sm:$0xff] %vm1546, %v1487
  %1597 = vst.msk [vmem:[%s3 + $0x190] sm:$0xff] %vm1546, %v1492
  %1598 = vst.msk [vmem:[%s3 + $0x198] sm:$0xff] %vm1546, %v1495
  %1599 = vst.msk [vmem:[%s3 + $0x1a0] sm:$0xff] %vm1546, %v1500
  %1600 = vst.msk [vmem:[%s3 + $0x1a8] sm:$0xff] %vm1546, %v1503
  %1601 = vst.msk [vmem:[%s3 + $0x1b0] sm:$0xff] %vm1546, %v1508
  %1602 = vst.msk [vmem:[%s3 + $0x1b8] sm:$0xff] %vm1546, %v1511
  %1603 = vst.msk [vmem:[%s3 + $0x1c0] sm:$0xff] %vm1546, %v1516
  %1604 = vst.msk [vmem:[%s3 + $0x1c8] sm:$0xff] %vm1546, %v1519
  %1605 = vst.msk [vmem:[%s3 + $0x1d0] sm:$0xff] %vm1546, %v1524
  %1606 = vst.msk [vmem:[%s3 + $0x1d8] sm:$0xff] %vm1546, %v1527
  %1607 = vst.msk [vmem:[%s3 + $0x1e0] sm:$0xff] %vm1546, %v1532
  %1608 = vst.msk [vmem:[%s3 + $0x1e8] sm:$0xff] %vm1546, %v1535
  %1609 = vst.msk [vmem:[%s3 + $0x1f0] sm:$0xff] %vm1546, %v1540
  %1610 = vst.msk [vmem:[%s3 + $0x1f8] sm:$0xff] %vm1546, %v1543
  // Predicated region
  $region14: #{tpu_custom_call.1} parent=0 // pred_check
    _
  $region15: #{tpu_custom_call.1} parent=0 // pred_check_branch
    %1612 = sbr.rel (0) target = $region17
  $region16: #{tpu_custom_call.1} parent=0 // pred_region
    _
  $region17: #{tpu_custom_call.1} parent=0 // pred_fallthru
    _
  // Predicated region
  $region18: #{tpu_custom_call.1} parent=0 // pred_check
    _
  $region19: #{tpu_custom_call.1} parent=0 // pred_check_branch
    %1614 = sbr.rel (0) target = $region21
  $region20: #{tpu_custom_call.1} parent=0 // pred_region
    _
  $region21: #{tpu_custom_call.1} parent=0 // pred_fallthru
    _

</llo_original>
